<compile_context>
chip_gen: v7x
topology: tpu7x:2x2x1
jax: 0.10.0
libtpu: 0.0.40
codegen_flags: <defaults>
</compile_context>

<pallas_src>
import jax
import jax.numpy as jnp
from jax.experimental import pallas as pl
from jax.experimental.pallas import tpu as pltpu

IN_DIM = 101
HIDDEN_DIM = 16
LATENT_DIM = 2
BN_EPS = 1e-5
PAD = 128  # lane-padded feature width used for every layer inside the kernel

# Row offsets of the six zero-padded 128x128 weight blocks inside the weight slab.
_W_NAMES = ("w1", "w2", "w3", "w4", "w5", "w6")
_W_OFF = {name: i * PAD for i, name in enumerate(_W_NAMES)}
_W_ROWS = len(_W_NAMES) * PAD  # 768

# Row index of each per-feature vector inside the (16, 128) vector slab.
# b1/b2/b4/b5 are intentionally absent: they feed training-mode BatchNorm1d
# layers, where the batch-mean subtraction cancels them exactly.
_V_ROW = {
    "g1": 0, "be1": 1,
    "g2": 2, "be2": 3,
    "b3": 4,
    "g4": 5, "be4": 6,
    "g5": 7, "be5": 8,
    "b6": 9,
}
_V_ROWS = 16  # padded to a multiple of 8 sublanes


def autoencoder_kernel(x_ref, w_ref, v_ref, out_ref, loss_ref, xp_ref):
    # x_ref:   (B, 101)   raw input (no host-side pad / extra HBM round trip)
    # w_ref:   (768, 128) bf16: six zero-padded 128x128 weight blocks (x @ W layout)
    # v_ref:   (16, 128)  f32: gammas / betas / b3 / b6, one per row, zero-padded lanes
    # out_ref: (B, 256)   lanes [0:128) = recon (padded), [128:256) = z (padded)
    # loss_ref:(1, 1)     SMEM scalar MSE loss
    # xp_ref:  (B, 128)   VMEM scratch: lane-padded input
    batch = x_ref.shape[0]

    # Pad the input to 128 lanes in VMEM: one unmasked full zero store, then a
    # masked 101-lane store.  Padded lanes are exactly zero.
    xp_ref[...] = jnp.zeros_like(xp_ref)
    xp_ref[:, 0:IN_DIM] = x_ref[...]
    x = xp_ref[...]                       # (B, 128) f32, lanes >= IN_DIM are zero

    def w(name):
        off = _W_OFF[name]
        return w_ref[off:off + PAD, :]    # static, 128-row-aligned bf16 block

    def vrow(name):
        r = _V_ROW[name]
        # Per-row ref load (no whole-slab vreg residency + value slicing).
        # NOTE: could become a stride-0 sublane-broadcast load (pl.ds(r, B, stride=0))
        # to move the broadcast into the vector-load slot.
        return v_ref[pl.ds(r, 1), :]      # (1, 128) f32

    def matmul(h, name):
        # bf16 x bf16 MXU matmul with f32 accumulation (matches default TPU
        # matmul precision for f32 inputs); weight DMA is half-width.
        return jnp.dot(h.astype(jnp.bfloat16), w(name),
                       preferred_element_type=jnp.float32)

    def bn_relu(h, gname, bname):
        # Training-mode BatchNorm1d (batch mean, biased variance) + ReLU with a
        # fused affine: relu((h - mu) * (g * rsqrt(var + eps)) + beta).
        # Reductions are over the batch (sublane) axis, so zero-padded lanes
        # stay exactly zero (gamma/beta padded lanes are zero).
        mu = jnp.mean(h, axis=0, keepdims=True)                      # (1, 128)
        hm = h - mu
        var = jnp.mean(jnp.square(hm), axis=0, keepdims=True)        # (1, 128)
        scale = vrow(gname) * jax.lax.rsqrt(var + BN_EPS)            # (1, 128)
        return jnp.maximum(hm * scale + vrow(bname), 0.0)

    # ----- encoder -----  (b1, b2 cancel under training-mode BN -> omitted)
    h = bn_relu(matmul(x, "w1"), "g1", "be1")
    h = bn_relu(matmul(h, "w2"), "g2", "be2")
    z = matmul(h, "w3") + vrow("b3")

    # ----- decoder -----  (b4, b5 cancel under training-mode BN -> omitted)
    h = bn_relu(matmul(z, "w4"), "g4", "be4")
    h = bn_relu(matmul(h, "w5"), "g5", "be5")
    recon = matmul(h, "w6") + vrow("b6")

    # Single lane-dense output slab: both stores are 128-lane aligned / unmasked.
    out_ref[:, 0:PAD] = recon
    out_ref[:, PAD:2 * PAD] = z

    # MSE over the real (un-padded) elements.  Padded lanes of x and recon are
    # both exactly zero (w6/b6 padded lanes are zero), so they contribute
    # nothing; divide by the true element count.  Staged reduce: sublanes, lanes.
    d = x - recon
    total = jnp.sum(jnp.sum(d * d, axis=0, keepdims=True), axis=1, keepdims=True)
    loss_ref[0, 0] = total[0, 0] * (1.0 / (batch * IN_DIM))


@jax.jit
def autoencoder_forward(x, w_slab, v_slab):
    """Full AutoEncoder forward in one Pallas kernel.

    Returns (x_recon, z, loss) as device arrays (no host sync here).
    """
    batch, in_dim = x.shape
    assert in_dim == IN_DIM
    x = x.astype(jnp.float32)

    vmem = pl.BlockSpec(memory_space=pltpu.MemorySpace.VMEM)
    smem = pl.BlockSpec(memory_space=pltpu.MemorySpace.SMEM)

    out_slab, loss = pl.pallas_call(
        autoencoder_kernel,
        out_shape=(
            jax.ShapeDtypeStruct((batch, 2 * PAD), jnp.float32),  # recon | z slab
            jax.ShapeDtypeStruct((1, 1), jnp.float32),            # scalar loss (SMEM)
        ),
        in_specs=[vmem, vmem, vmem],
        out_specs=(vmem, smem),
        scratch_shapes=[pltpu.VMEM((batch, PAD), jnp.float32)],   # lane-padded x
    )(x, w_slab, v_slab)

    x_recon = out_slab[:, :IN_DIM]
    z = out_slab[:, PAD:PAD + LATENT_DIM]
    return x_recon, z, loss[0, 0]


def pack_params(params):
    """Pack the parameters the kernel needs into two lane-dense slabs.

    Weight slab: six (128, 128) zero-padded blocks, bf16, stacked -> (768, 128).
    Vector slab: gammas / betas / b3 / b6 (b1,b2,b4,b5 cancel under training-mode
    BN), one per row, zero-padded lanes -> (16, 128) f32.
    """
    def pad_w(wm):
        r, c = wm.shape
        return jnp.pad(wm.astype(jnp.float32),
                       ((0, PAD - r), (0, PAD - c))).astype(jnp.bfloat16)

    w_slab = jnp.concatenate([pad_w(params[k]) for k in _W_NAMES], axis=0)
    assert w_slab.shape == (_W_ROWS, PAD)

    v_slab = jnp.zeros((_V_ROWS, PAD), jnp.float32)
    for name, r in _V_ROW.items():
        vec = params[name].astype(jnp.float32).reshape(1, -1)
        vec = jnp.pad(vec, ((0, 0), (0, PAD - vec.shape[1])))
        v_slab = v_slab.at[r:r + 1, :].set(vec)
    return w_slab, v_slab


def init_params(key):
    """Deterministic parameter init (shapes match the torch module).

    Linear weights are stored transposed: [in_features, out_features].
    BatchNorm gamma = 1, beta = 0 (torch defaults, training mode).
    All six biases are created (the torch module has them); the kernel only
    consumes b3 and b6.
    """
    keys = jax.random.split(key, 12)
    ki = iter(keys)

    def linear(in_f, out_f):
        bound = 1.0 / jnp.sqrt(in_f)
        w = jax.random.uniform(next(ki), (in_f, out_f), jnp.float32, -bound, bound)
        b = jax.random.uniform(next(ki), (1, out_f), jnp.float32, -bound, bound)
        return w, b

    params = {}
    # encoder
    params["w1"], params["b1"] = linear(IN_DIM, HIDDEN_DIM)
    params["g1"] = jnp.ones((1, HIDDEN_DIM), jnp.float32)
    params["be1"] = jnp.zeros((1, HIDDEN_DIM), jnp.float32)
    params["w2"], params["b2"] = linear(HIDDEN_DIM, HIDDEN_DIM)
    params["g2"] = jnp.ones((1, HIDDEN_DIM), jnp.float32)
    params["be2"] = jnp.zeros((1, HIDDEN_DIM), jnp.float32)
    params["w3"], params["b3"] = linear(HIDDEN_DIM, LATENT_DIM)
    # decoder
    params["w4"], params["b4"] = linear(LATENT_DIM, HIDDEN_DIM)
    params["g4"] = jnp.ones((1, HIDDEN_DIM), jnp.float32)
    params["be4"] = jnp.zeros((1, HIDDEN_DIM), jnp.float32)
    params["w5"], params["b5"] = linear(HIDDEN_DIM, HIDDEN_DIM)
    params["g5"] = jnp.ones((1, HIDDEN_DIM), jnp.float32)
    params["be5"] = jnp.zeros((1, HIDDEN_DIM), jnp.float32)
    params["w6"], params["b6"] = linear(HIDDEN_DIM, IN_DIM)
    return params


def _reference_forward(x, params):
    """Pure-JAX reference mirroring the torch module (training-mode BN).

    Uses ALL parameters, including b1/b2/b4/b5 (which the kernel omits because
    they cancel exactly under batch-mean subtraction).
    """
    def bn_relu(h, g, b):
        mu = jnp.mean(h, axis=0, keepdims=True)
        var = jnp.mean((h - mu) ** 2, axis=0, keepdims=True)
        return jnp.maximum((h - mu) / jnp.sqrt(var + BN_EPS) * g + b, 0.0)

    h = x @ params["w1"] + params["b1"]
    h = bn_relu(h, params["g1"], params["be1"])
    h = h @ params["w2"] + params["b2"]
    h = bn_relu(h, params["g2"], params["be2"])
    z = h @ params["w3"] + params["b3"]
    h = z @ params["w4"] + params["b4"]
    h = bn_relu(h, params["g4"], params["be4"])
    h = h @ params["w5"] + params["b5"]
    h = bn_relu(h, params["g5"], params["be5"])
    x_recon = h @ params["w6"] + params["b6"]
    loss = jnp.mean((x - x_recon) ** 2)
    return x_recon, z, loss


if __name__ == "__main__":
    key = jax.random.PRNGKey(0)
    pkey, xkey = jax.random.split(key)

    params = init_params(pkey)
    w_slab, v_slab = pack_params(params)

    batch = 128  # sublane-aligned demo batch (BatchNorm needs batch > 1)
    x = jax.random.normal(xkey, (batch, IN_DIM), jnp.float32)

    x_recon, z, loss = autoencoder_forward(x, w_slab, v_slab)
    jax.block_until_ready((x_recon, z, loss))

    # Mirror the torch return signature; the host sync (float) happens only
    # here, outside the jitted forward path.
    result = (x_recon, z, loss, (float(loss), 0))

    assert x_recon.shape == (batch, IN_DIM)
    assert z.shape == (batch, LATENT_DIM)
    assert loss.shape == ()
    assert result[3][1] == 0
    assert jnp.isfinite(loss)

    # Loose-tolerance check against the pure-JAX f32 reference (bf16 MXU
    # weights / default TPU matmul precision vs XLA default precision).
    ref_recon, ref_z, ref_loss = _reference_forward(x, params)
    assert jnp.allclose(x_recon, ref_recon, rtol=5e-2, atol=5e-2)
    assert jnp.allclose(z, ref_z, rtol=5e-2, atol=5e-2)
    assert jnp.allclose(loss, ref_loss, rtol=5e-2, atol=5e-2)

    print("KERNEL_OK")
</pallas_src>

<mosaic_0001>
module attributes {stable_mosaic.version = 11 : i64} {
  func.func @autoencoder_kernel(%arg0: memref<128x101xf32, #tpu.memory_space<vmem>>, %arg1: memref<768x128xbf16, #tpu.memory_space<vmem>>, %arg2: memref<16x128xf32, #tpu.memory_space<vmem>>, %arg3: memref<128x256xf32, #tpu.memory_space<vmem>>, %arg4: memref<1x1xf32, #tpu.memory_space<smem>>, %arg5: memref<128x128xf32, #tpu.memory_space<vmem>>) attributes {dimension_semantics = [], scalar_prefetch = 0 : i64, scratch_operands = 1 : i64, tpu.core_type = #tpu.core_type<tc>} {
    %cst = arith.constant 0.000000e+00 : f32
    %0 = vector.broadcast %cst : f32 to vector<128x128xf32>
    %c0 = arith.constant 0 : index
    %c0_0 = arith.constant 0 : index
    %1 = vector.load %arg5[%c0, %c0_0] : memref<128x128xf32, #tpu.memory_space<vmem>>, vector<128x128xf32>
    tpu.vector_store %arg5[%c0, %c0_0], %0 {strides = array<i32>} : memref<128x128xf32, #tpu.memory_space<vmem>>, vector<128x128xf32>,
    %c0_1 = arith.constant 0 : index
    %c0_2 = arith.constant 0 : index
    %2 = vector.load %arg0[%c0_1, %c0_2] : memref<128x101xf32, #tpu.memory_space<vmem>>, vector<128x101xf32>
    %c0_3 = arith.constant 0 : index
    %c0_4 = arith.constant 0 : index
    %3 = vector.load %arg5[%c0_3, %c0_4] : memref<128x128xf32, #tpu.memory_space<vmem>>, vector<128x101xf32>
    tpu.vector_store %arg5[%c0_3, %c0_4], %2 {strides = array<i32>} : memref<128x128xf32, #tpu.memory_space<vmem>>, vector<128x101xf32>,
    %c0_5 = arith.constant 0 : index
    %c0_6 = arith.constant 0 : index
    %4 = vector.load %arg5[%c0_5, %c0_6] : memref<128x128xf32, #tpu.memory_space<vmem>>, vector<128x128xf32>
    %5 = arith.truncf %4 : vector<128x128xf32> to vector<128x128xbf16>
    %c0_7 = arith.constant 0 : index
    %c0_8 = arith.constant 0 : index
    %6 = vector.load %arg1[%c0_7, %c0_8] : memref<768x128xbf16, #tpu.memory_space<vmem>>, vector<128x128xbf16>
    %cst_9 = arith.constant dense<0.000000e+00> : vector<128x128xf32>
    %7 = tpu.matmul %5, %6, %cst_9 {dimension_numbers = #tpu.dot_dimension_numbers<[1], [0], [0], [1], [0, 0, 1, 1], [], []>} : vector<128x128xbf16>, vector<128x128xbf16>, vector<128x128xf32> -> vector<128x128xf32>
    %cst_10 = arith.constant dense<0.000000e+00> : vector<128xf32>
    %8 = vector.multi_reduction <add>, %7, %cst_10 [0] : vector<128x128xf32> to vector<128xf32>
    %9 = vector.shape_cast %8 : vector<128xf32> to vector<1x128xf32>
    %cst_11 = arith.constant 1.280000e+02 : f32
    %10 = vector.broadcast %cst_11 : f32 to vector<1x128xf32>
    %11 = arith.divf %9, %10 : vector<1x128xf32>
    %12 = vector.broadcast %11 : vector<1x128xf32> to vector<128x128xf32>
    %13 = arith.subf %7, %12 : vector<128x128xf32>
    %14 = arith.mulf %13, %13 : vector<128x128xf32>
    %cst_12 = arith.constant dense<0.000000e+00> : vector<128xf32>
    %15 = vector.multi_reduction <add>, %14, %cst_12 [0] : vector<128x128xf32> to vector<128xf32>
    %16 = vector.shape_cast %15 : vector<128xf32> to vector<1x128xf32>
    %cst_13 = arith.constant 1.280000e+02 : f32
    %17 = vector.broadcast %cst_13 : f32 to vector<1x128xf32>
    %18 = arith.divf %16, %17 : vector<1x128xf32>
    %c0_14 = arith.constant 0 : index
    %c0_15 = arith.constant 0 : index
    %19 = vector.load %arg2[%c0_14, %c0_15] : memref<16x128xf32, #tpu.memory_space<vmem>>, vector<1x128xf32>
    %cst_16 = arith.constant 9.99999974E-6 : f32
    %20 = vector.broadcast %cst_16 : f32 to vector<1x128xf32>
    %21 = arith.addf %18, %20 : vector<1x128xf32>
    %22 = math.rsqrt %21 : vector<1x128xf32>
    %23 = arith.mulf %19, %22 : vector<1x128xf32>
    %24 = vector.broadcast %23 : vector<1x128xf32> to vector<128x128xf32>
    %25 = arith.mulf %13, %24 : vector<128x128xf32>
    %c1 = arith.constant 1 : index
    %c0_17 = arith.constant 0 : index
    %26 = vector.load %arg2[%c1, %c0_17] : memref<16x128xf32, #tpu.memory_space<vmem>>, vector<1x128xf32>
    %27 = vector.broadcast %26 : vector<1x128xf32> to vector<128x128xf32>
    %28 = arith.addf %25, %27 : vector<128x128xf32>
    %cst_18 = arith.constant 0.000000e+00 : f32
    %29 = vector.broadcast %cst_18 : f32 to vector<128x128xf32>
    %30 = arith.maximumf %28, %29 : vector<128x128xf32>
    %31 = arith.truncf %30 : vector<128x128xf32> to vector<128x128xbf16>
    %c128 = arith.constant 128 : index
    %c0_19 = arith.constant 0 : index
    %32 = vector.load %arg1[%c128, %c0_19] : memref<768x128xbf16, #tpu.memory_space<vmem>>, vector<128x128xbf16>
    %cst_20 = arith.constant dense<0.000000e+00> : vector<128x128xf32>
    %33 = tpu.matmul %31, %32, %cst_20 {dimension_numbers = #tpu.dot_dimension_numbers<[1], [0], [0], [1], [0, 0, 1, 1], [], []>} : vector<128x128xbf16>, vector<128x128xbf16>, vector<128x128xf32> -> vector<128x128xf32>
    %cst_21 = arith.constant dense<0.000000e+00> : vector<128xf32>
    %34 = vector.multi_reduction <add>, %33, %cst_21 [0] : vector<128x128xf32> to vector<128xf32>
    %35 = vector.shape_cast %34 : vector<128xf32> to vector<1x128xf32>
    %cst_22 = arith.constant 1.280000e+02 : f32
    %36 = vector.broadcast %cst_22 : f32 to vector<1x128xf32>
    %37 = arith.divf %35, %36 : vector<1x128xf32>
    %38 = vector.broadcast %37 : vector<1x128xf32> to vector<128x128xf32>
    %39 = arith.subf %33, %38 : vector<128x128xf32>
    %40 = arith.mulf %39, %39 : vector<128x128xf32>
    %cst_23 = arith.constant dense<0.000000e+00> : vector<128xf32>
    %41 = vector.multi_reduction <add>, %40, %cst_23 [0] : vector<128x128xf32> to vector<128xf32>
    %42 = vector.shape_cast %41 : vector<128xf32> to vector<1x128xf32>
    %cst_24 = arith.constant 1.280000e+02 : f32
    %43 = vector.broadcast %cst_24 : f32 to vector<1x128xf32>
    %44 = arith.divf %42, %43 : vector<1x128xf32>
    %c2 = arith.constant 2 : index
    %c0_25 = arith.constant 0 : index
    %45 = vector.load %arg2[%c2, %c0_25] : memref<16x128xf32, #tpu.memory_space<vmem>>, vector<1x128xf32>
    %cst_26 = arith.constant 9.99999974E-6 : f32
    %46 = vector.broadcast %cst_26 : f32 to vector<1x128xf32>
    %47 = arith.addf %44, %46 : vector<1x128xf32>
    %48 = math.rsqrt %47 : vector<1x128xf32>
    %49 = arith.mulf %45, %48 : vector<1x128xf32>
    %50 = vector.broadcast %49 : vector<1x128xf32> to vector<128x128xf32>
    %51 = arith.mulf %39, %50 : vector<128x128xf32>
    %c3 = arith.constant 3 : index
    %c0_27 = arith.constant 0 : index
    %52 = vector.load %arg2[%c3, %c0_27] : memref<16x128xf32, #tpu.memory_space<vmem>>, vector<1x128xf32>
    %53 = vector.broadcast %52 : vector<1x128xf32> to vector<128x128xf32>
    %54 = arith.addf %51, %53 : vector<128x128xf32>
    %cst_28 = arith.constant 0.000000e+00 : f32
    %55 = vector.broadcast %cst_28 : f32 to vector<128x128xf32>
    %56 = arith.maximumf %54, %55 : vector<128x128xf32>
    %57 = arith.truncf %56 : vector<128x128xf32> to vector<128x128xbf16>
    %c256 = arith.constant 256 : index
    %c0_29 = arith.constant 0 : index
    %58 = vector.load %arg1[%c256, %c0_29] : memref<768x128xbf16, #tpu.memory_space<vmem>>, vector<128x128xbf16>
    %cst_30 = arith.constant dense<0.000000e+00> : vector<128x128xf32>
    %59 = tpu.matmul %57, %58, %cst_30 {dimension_numbers = #tpu.dot_dimension_numbers<[1], [0], [0], [1], [0, 0, 1, 1], [], []>} : vector<128x128xbf16>, vector<128x128xbf16>, vector<128x128xf32> -> vector<128x128xf32>
    %c4 = arith.constant 4 : index
    %c0_31 = arith.constant 0 : index
    %60 = vector.load %arg2[%c4, %c0_31] : memref<16x128xf32, #tpu.memory_space<vmem>>, vector<1x128xf32>
    %61 = vector.broadcast %60 : vector<1x128xf32> to vector<128x128xf32>
    %62 = arith.addf %59, %61 : vector<128x128xf32>
    %63 = arith.truncf %62 : vector<128x128xf32> to vector<128x128xbf16>
    %c384 = arith.constant 384 : index
    %c0_32 = arith.constant 0 : index
    %64 = vector.load %arg1[%c384, %c0_32] : memref<768x128xbf16, #tpu.memory_space<vmem>>, vector<128x128xbf16>
    %cst_33 = arith.constant dense<0.000000e+00> : vector<128x128xf32>
    %65 = tpu.matmul %63, %64, %cst_33 {dimension_numbers = #tpu.dot_dimension_numbers<[1], [0], [0], [1], [0, 0, 1, 1], [], []>} : vector<128x128xbf16>, vector<128x128xbf16>, vector<128x128xf32> -> vector<128x128xf32>
    %cst_34 = arith.constant dense<0.000000e+00> : vector<128xf32>
    %66 = vector.multi_reduction <add>, %65, %cst_34 [0] : vector<128x128xf32> to vector<128xf32>
    %67 = vector.shape_cast %66 : vector<128xf32> to vector<1x128xf32>
    %cst_35 = arith.constant 1.280000e+02 : f32
    %68 = vector.broadcast %cst_35 : f32 to vector<1x128xf32>
    %69 = arith.divf %67, %68 : vector<1x128xf32>
    %70 = vector.broadcast %69 : vector<1x128xf32> to vector<128x128xf32>
    %71 = arith.subf %65, %70 : vector<128x128xf32>
    %72 = arith.mulf %71, %71 : vector<128x128xf32>
    %cst_36 = arith.constant dense<0.000000e+00> : vector<128xf32>
    %73 = vector.multi_reduction <add>, %72, %cst_36 [0] : vector<128x128xf32> to vector<128xf32>
    %74 = vector.shape_cast %73 : vector<128xf32> to vector<1x128xf32>
    %cst_37 = arith.constant 1.280000e+02 : f32
    %75 = vector.broadcast %cst_37 : f32 to vector<1x128xf32>
    %76 = arith.divf %74, %75 : vector<1x128xf32>
    %c5 = arith.constant 5 : index
    %c0_38 = arith.constant 0 : index
    %77 = vector.load %arg2[%c5, %c0_38] : memref<16x128xf32, #tpu.memory_space<vmem>>, vector<1x128xf32>
    %cst_39 = arith.constant 9.99999974E-6 : f32
    %78 = vector.broadcast %cst_39 : f32 to vector<1x128xf32>
    %79 = arith.addf %76, %78 : vector<1x128xf32>
    %80 = math.rsqrt %79 : vector<1x128xf32>
    %81 = arith.mulf %77, %80 : vector<1x128xf32>
    %82 = vector.broadcast %81 : vector<1x128xf32> to vector<128x128xf32>
    %83 = arith.mulf %71, %82 : vector<128x128xf32>
    %c6 = arith.constant 6 : index
    %c0_40 = arith.constant 0 : index
    %84 = vector.load %arg2[%c6, %c0_40] : memref<16x128xf32, #tpu.memory_space<vmem>>, vector<1x128xf32>
    %85 = vector.broadcast %84 : vector<1x128xf32> to vector<128x128xf32>
    %86 = arith.addf %83, %85 : vector<128x128xf32>
    %cst_41 = arith.constant 0.000000e+00 : f32
    %87 = vector.broadcast %cst_41 : f32 to vector<128x128xf32>
    %88 = arith.maximumf %86, %87 : vector<128x128xf32>
    %89 = arith.truncf %88 : vector<128x128xf32> to vector<128x128xbf16>
    %c512 = arith.constant 512 : index
    %c0_42 = arith.constant 0 : index
    %90 = vector.load %arg1[%c512, %c0_42] : memref<768x128xbf16, #tpu.memory_space<vmem>>, vector<128x128xbf16>
    %cst_43 = arith.constant dense<0.000000e+00> : vector<128x128xf32>
    %91 = tpu.matmul %89, %90, %cst_43 {dimension_numbers = #tpu.dot_dimension_numbers<[1], [0], [0], [1], [0, 0, 1, 1], [], []>} : vector<128x128xbf16>, vector<128x128xbf16>, vector<128x128xf32> -> vector<128x128xf32>
    %cst_44 = arith.constant dense<0.000000e+00> : vector<128xf32>
    %92 = vector.multi_reduction <add>, %91, %cst_44 [0] : vector<128x128xf32> to vector<128xf32>
    %93 = vector.shape_cast %92 : vector<128xf32> to vector<1x128xf32>
    %cst_45 = arith.constant 1.280000e+02 : f32
    %94 = vector.broadcast %cst_45 : f32 to vector<1x128xf32>
    %95 = arith.divf %93, %94 : vector<1x128xf32>
    %96 = vector.broadcast %95 : vector<1x128xf32> to vector<128x128xf32>
    %97 = arith.subf %91, %96 : vector<128x128xf32>
    %98 = arith.mulf %97, %97 : vector<128x128xf32>
    %cst_46 = arith.constant dense<0.000000e+00> : vector<128xf32>
    %99 = vector.multi_reduction <add>, %98, %cst_46 [0] : vector<128x128xf32> to vector<128xf32>
    %100 = vector.shape_cast %99 : vector<128xf32> to vector<1x128xf32>
    %cst_47 = arith.constant 1.280000e+02 : f32
    %101 = vector.broadcast %cst_47 : f32 to vector<1x128xf32>
    %102 = arith.divf %100, %101 : vector<1x128xf32>
    %c7 = arith.constant 7 : index
    %c0_48 = arith.constant 0 : index
    %103 = vector.load %arg2[%c7, %c0_48] : memref<16x128xf32, #tpu.memory_space<vmem>>, vector<1x128xf32>
    %cst_49 = arith.constant 9.99999974E-6 : f32
    %104 = vector.broadcast %cst_49 : f32 to vector<1x128xf32>
    %105 = arith.addf %102, %104 : vector<1x128xf32>
    %106 = math.rsqrt %105 : vector<1x128xf32>
    %107 = arith.mulf %103, %106 : vector<1x128xf32>
    %108 = vector.broadcast %107 : vector<1x128xf32> to vector<128x128xf32>
    %109 = arith.mulf %97, %108 : vector<128x128xf32>
    %c8 = arith.constant 8 : index
    %c0_50 = arith.constant 0 : index
    %110 = vector.load %arg2[%c8, %c0_50] : memref<16x128xf32, #tpu.memory_space<vmem>>, vector<1x128xf32>
    %111 = vector.broadcast %110 : vector<1x128xf32> to vector<128x128xf32>
    %112 = arith.addf %109, %111 : vector<128x128xf32>
    %cst_51 = arith.constant 0.000000e+00 : f32
    %113 = vector.broadcast %cst_51 : f32 to vector<128x128xf32>
    %114 = arith.maximumf %112, %113 : vector<128x128xf32>
    %115 = arith.truncf %114 : vector<128x128xf32> to vector<128x128xbf16>
    %c640 = arith.constant 640 : index
    %c0_52 = arith.constant 0 : index
    %116 = vector.load %arg1[%c640, %c0_52] : memref<768x128xbf16, #tpu.memory_space<vmem>>, vector<128x128xbf16>
    %cst_53 = arith.constant dense<0.000000e+00> : vector<128x128xf32>
    %117 = tpu.matmul %115, %116, %cst_53 {dimension_numbers = #tpu.dot_dimension_numbers<[1], [0], [0], [1], [0, 0, 1, 1], [], []>} : vector<128x128xbf16>, vector<128x128xbf16>, vector<128x128xf32> -> vector<128x128xf32>
    %c9 = arith.constant 9 : index
    %c0_54 = arith.constant 0 : index
    %118 = vector.load %arg2[%c9, %c0_54] : memref<16x128xf32, #tpu.memory_space<vmem>>, vector<1x128xf32>
    %119 = vector.broadcast %118 : vector<1x128xf32> to vector<128x128xf32>
    %120 = arith.addf %117, %119 : vector<128x128xf32>
    %c0_55 = arith.constant 0 : index
    %c0_56 = arith.constant 0 : index
    %121 = vector.load %arg3[%c0_55, %c0_56] : memref<128x256xf32, #tpu.memory_space<vmem>>, vector<128x128xf32>
    tpu.vector_store %arg3[%c0_55, %c0_56], %120 {strides = array<i32>} : memref<128x256xf32, #tpu.memory_space<vmem>>, vector<128x128xf32>,
    %c0_57 = arith.constant 0 : index
    %c128_58 = arith.constant 128 : index
    %122 = vector.load %arg3[%c0_57, %c128_58] : memref<128x256xf32, #tpu.memory_space<vmem>>, vector<128x128xf32>
    tpu.vector_store %arg3[%c0_57, %c128_58], %62 {strides = array<i32>} : memref<128x256xf32, #tpu.memory_space<vmem>>, vector<128x128xf32>,
    %123 = arith.subf %4, %120 : vector<128x128xf32>
    %124 = arith.mulf %123, %123 : vector<128x128xf32>
    %cst_59 = arith.constant dense<0.000000e+00> : vector<128xf32>
    %125 = vector.multi_reduction <add>, %124, %cst_59 [0] : vector<128x128xf32> to vector<128xf32>
    %126 = vector.shape_cast %125 : vector<128xf32> to vector<1x128xf32>
    %cst_60 = arith.constant dense<0.000000e+00> : vector<1xf32>
    %127 = vector.multi_reduction <add>, %126, %cst_60 [1] : vector<1x128xf32> to vector<1xf32>
    %128 = vector.shape_cast %127 : vector<1xf32> to vector<1x1xf32>
    %129 = vector.extract %128[0, 0] : f32 from vector<1x1xf32>
    %cst_61 = arith.constant 7.73514839E-5 : f32
    %130 = arith.mulf %129, %cst_61 : f32
    %c0_62 = arith.constant 0 : index
    %c0_63 = arith.constant 0 : index
    %131 = memref.load %arg4[%c0_62, %c0_63] : memref<1x1xf32, #tpu.memory_space<smem>>
    memref.store %130, %arg4[%c0_62, %c0_63] : memref<1x1xf32, #tpu.memory_space<smem>>
    return
  }
}

</mosaic_0001>

<llo_original>
// kernel: autoencoder_forward.1
$region0: #{autoencoder_forward.1}
  #allocation0 [shape = 'u32[]', space=smem, size = 0x4, offset = 0x4, fixed_abs, tag = 'smem constant byte address 0x4 - core index']
  #allocation1 [shape = 'u32[144,128]{1,0:T(1,128)}', space=vmem, size = 0x12000, scoped, tag = 'internal scratch']
  #allocation2 [shape = 'f32[128,128]{1,0:T(8,128)}', space=vmem, size = 0x10000, scoped, tag = 'scratch operand']
  %s0 = inlined_call_operand.vmem [shape: f32[128,101], index: 0, kind: input, shape index: {}]
  %s1 = inlined_call_operand.hbm [shape: bf16[768,128], index: 1, kind: input, shape index: {}]
  %s2 = inlined_call_operand.vmem [shape: f32[16,128], index: 2, kind: input, shape index: {}]
  %s3 = inlined_call_operand.vmem [shape: f32[128,256], index: 3, kind: output, shape index: {0}]
  %s4 = inlined_call_operand.hbm [shape: f32[1,1], index: 4, kind: output, shape index: {1}]
  %5 = xla_tuple %s3, %s4
  %s6 = sld [smem:[#allocation0]]
  $region34: #{autoencoder_forward.1} parent=0
    _
  %s8 = ssub.s32 1, %s6
  %s9 = scalar_select 0, %s8, %s6
  $region1: #{autoencoder_forward.1} parent=0
    #allocation3 [shape = 'u8[196608]{0}', space=vmem, size = 0x30000, scoped, tag = 'input window, operand 1, single buffered']
    #allocation4 [shape = 's32[1]{0}', space=sflag, size = 0x4, scoped, tag = 'scoped memory for autoencoder_forward.1']
    #allocation5 [shape = 's32[1]{0}', space=sflag, size = 0x4, scoped, tag = 'scoped memory for autoencoder_forward.1']
    #allocation6 [shape = 'u8[512]{0}', space=smem, size = 0x200, scoped, tag = 'output window, operand 1, single buffered']
    %10 = vsyncpa [#allocation4], 0
    %11 = vsyncpa [#allocation5], 0
    // Predicated region
    $region2: #{autoencoder_forward.1} parent=1 // pred_check
      _
    $region3: #{autoencoder_forward.1} parent=1 // pred_check_branch
      %13 = sbr.rel (0) target = $region5
    $region4: #{autoencoder_forward.1} parent=1 // pred_region
      _
    $region5: #{autoencoder_forward.1} parent=1 // pred_fallthru
      _
    // Predicated region
    $region6: #{autoencoder_forward.1} parent=1 // pred_check
      _
    $region7: #{autoencoder_forward.1} parent=1 // pred_check_branch
      %15 = sbr.rel (0) target = $region9
    $region8: #{autoencoder_forward.1} parent=1 // pred_region
      %s17 = ssub.s32 6144, 6144
      %18 = vsyncadd [#allocation4], %s17
      %s19 = sshll.u32 [#allocation3], 4
      %s20 = int_to_ptr.vmem [resolvable:$true] %s19
      %25 = dma.hbm_to_vmem [thread:$0]  %s1, 6144, %s20, [#allocation4], 64, 64, 4
    $region9: #{autoencoder_forward.1} parent=1 // pred_fallthru
      _
    // Predicated region
    $region10: #{autoencoder_forward.1} parent=1 // pred_check
      _
    $region11: #{autoencoder_forward.1} parent=1 // pred_check_branch
      %27 = sbr.rel (0) target = $region13
    $region12: #{autoencoder_forward.1} parent=1 // pred_region
      _
    $region13: #{autoencoder_forward.1} parent=1 // pred_fallthru
      _
    // Predicated region
    $region14: #{autoencoder_forward.1} parent=1 // pred_check
      _
    $region15: #{autoencoder_forward.1} parent=1 // pred_check_branch
      %29 = sbr.rel (0) target = $region17
    $region16: #{autoencoder_forward.1} parent=1 // pred_region
      %30 = dma.done [#allocation4], 6144
    $region17: #{autoencoder_forward.1} parent=1 // pred_fallthru
      _
    %32 = vst [vmem:[#allocation2] sm:$0xff] 0.0
    %33 = vst [vmem:[#allocation2 + $0x8] sm:$0xff] 0.0
    %34 = vst [vmem:[#allocation2 + $0x10] sm:$0xff] 0.0
    %35 = vst [vmem:[#allocation2 + $0x18] sm:$0xff] 0.0
    %36 = vst [vmem:[#allocation2 + $0x20] sm:$0xff] 0.0
    %37 = vst [vmem:[#allocation2 + $0x28] sm:$0xff] 0.0
    %38 = vst [vmem:[#allocation2 + $0x30] sm:$0xff] 0.0
    %39 = vst [vmem:[#allocation2 + $0x38] sm:$0xff] 0.0
    %40 = vst [vmem:[#allocation2 + $0x40] sm:$0xff] 0.0
    %41 = vst [vmem:[#allocation2 + $0x48] sm:$0xff] 0.0
    %42 = vst [vmem:[#allocation2 + $0x50] sm:$0xff] 0.0
    %43 = vst [vmem:[#allocation2 + $0x58] sm:$0xff] 0.0
    %44 = vst [vmem:[#allocation2 + $0x60] sm:$0xff] 0.0
    %45 = vst [vmem:[#allocation2 + $0x68] sm:$0xff] 0.0
    %46 = vst [vmem:[#allocation2 + $0x70] sm:$0xff] 0.0
    %47 = vst [vmem:[#allocation2 + $0x78] sm:$0xff] 0.0
    %v48 = vld [vmem:[%s0] sm:$0xff]
    %v49 = vld [vmem:[%s0 + $0x8] sm:$0xff]
    %v50 = vld [vmem:[%s0 + $0x10] sm:$0xff]
    %v51 = vld [vmem:[%s0 + $0x18] sm:$0xff]
    %v52 = vld [vmem:[%s0 + $0x20] sm:$0xff]
    %v53 = vld [vmem:[%s0 + $0x28] sm:$0xff]
    %v54 = vld [vmem:[%s0 + $0x30] sm:$0xff]
    %v55 = vld [vmem:[%s0 + $0x38] sm:$0xff]
    %v56 = vld [vmem:[%s0 + $0x40] sm:$0xff]
    %v57 = vld [vmem:[%s0 + $0x48] sm:$0xff]
    %v58 = vld [vmem:[%s0 + $0x50] sm:$0xff]
    %v59 = vld [vmem:[%s0 + $0x58] sm:$0xff]
    %v60 = vld [vmem:[%s0 + $0x60] sm:$0xff]
    %v61 = vld [vmem:[%s0 + $0x68] sm:$0xff]
    %v62 = vld [vmem:[%s0 + $0x70] sm:$0xff]
    %v63 = vld [vmem:[%s0 + $0x78] sm:$0xff]
    %vm64 = vcmask 826368
    %65 = vst.msk [vmem:[#allocation2] sm:$0xff] %vm64, %v48
    %66 = vst.msk [vmem:[#allocation2 + $0x8] sm:$0xff] %vm64, %v49
    %67 = vst.msk [vmem:[#allocation2 + $0x10] sm:$0xff] %vm64, %v50
    %68 = vst.msk [vmem:[#allocation2 + $0x18] sm:$0xff] %vm64, %v51
    %69 = vst.msk [vmem:[#allocation2 + $0x20] sm:$0xff] %vm64, %v52
    %70 = vst.msk [vmem:[#allocation2 + $0x28] sm:$0xff] %vm64, %v53
    %71 = vst.msk [vmem:[#allocation2 + $0x30] sm:$0xff] %vm64, %v54
    %72 = vst.msk [vmem:[#allocation2 + $0x38] sm:$0xff] %vm64, %v55
    %73 = vst.msk [vmem:[#allocation2 + $0x40] sm:$0xff] %vm64, %v56
    %74 = vst.msk [vmem:[#allocation2 + $0x48] sm:$0xff] %vm64, %v57
    %75 = vst.msk [vmem:[#allocation2 + $0x50] sm:$0xff] %vm64, %v58
    %76 = vst.msk [vmem:[#allocation2 + $0x58] sm:$0xff] %vm64, %v59
    %77 = vst.msk [vmem:[#allocation2 + $0x60] sm:$0xff] %vm64, %v60
    %78 = vst.msk [vmem:[#allocation2 + $0x68] sm:$0xff] %vm64, %v61
    %79 = vst.msk [vmem:[#allocation2 + $0x70] sm:$0xff] %vm64, %v62
    %80 = vst.msk [vmem:[#allocation2 + $0x78] sm:$0xff] %vm64, %v63
    %v81 = vld [vmem:[#allocation2] sm:$0xff]
    %v82 = vld [vmem:[#allocation2 + $0x8] sm:$0xff]
    %v83 = vld [vmem:[#allocation2 + $0x10] sm:$0xff]
    %v84 = vld [vmem:[#allocation2 + $0x18] sm:$0xff]
    %v85 = vld [vmem:[#allocation2 + $0x20] sm:$0xff]
    %v86 = vld [vmem:[#allocation2 + $0x28] sm:$0xff]
    %v87 = vld [vmem:[#allocation2 + $0x30] sm:$0xff]
    %v88 = vld [vmem:[#allocation2 + $0x38] sm:$0xff]
    %v89 = vld [vmem:[#allocation2 + $0x40] sm:$0xff]
    %v90 = vld [vmem:[#allocation2 + $0x48] sm:$0xff]
    %v91 = vld [vmem:[#allocation2 + $0x50] sm:$0xff]
    %v92 = vld [vmem:[#allocation2 + $0x58] sm:$0xff]
    %v93 = vld [vmem:[#allocation2 + $0x60] sm:$0xff]
    %v94 = vld [vmem:[#allocation2 + $0x68] sm:$0xff]
    %v95 = vld [vmem:[#allocation2 + $0x70] sm:$0xff]
    %v96 = vld [vmem:[#allocation2 + $0x78] sm:$0xff]
    %v97 = vpack.c.bf16 %v82, %v81
    %v98 = vpack.c.bf16 %v84, %v83
    %v99 = vpack.c.bf16 %v86, %v85
    %v100 = vpack.c.bf16 %v88, %v87
    %v101 = vpack.c.bf16 %v90, %v89
    %v102 = vpack.c.bf16 %v92, %v91
    %v103 = vpack.c.bf16 %v94, %v93
    %v104 = vpack.c.bf16 %v96, %v95
    %v105 = vld [vmem:[#allocation3] sm:$0xf]
    %v106 = vld [vmem:[#allocation3 + $0x4] sm:$0xf]
    %v107 = vld [vmem:[#allocation3 + $0x8] sm:$0xf]
    %v108 = vld [vmem:[#allocation3 + $0xc] sm:$0xf]
    %v109 = vld [vmem:[#allocation3 + $0x10] sm:$0xf]
    %v110 = vld [vmem:[#allocation3 + $0x14] sm:$0xf]
    %v111 = vld [vmem:[#allocation3 + $0x18] sm:$0xf]
    %v112 = vld [vmem:[#allocation3 + $0x1c] sm:$0xf]
    %v113 = vld [vmem:[#allocation3 + $0x20] sm:$0xf]
    %v114 = vld [vmem:[#allocation3 + $0x24] sm:$0xf]
    %v115 = vld [vmem:[#allocation3 + $0x28] sm:$0xf]
    %v116 = vld [vmem:[#allocation3 + $0x2c] sm:$0xf]
    %v117 = vld [vmem:[#allocation3 + $0x30] sm:$0xf]
    %v118 = vld [vmem:[#allocation3 + $0x34] sm:$0xf]
    %v119 = vld [vmem:[#allocation3 + $0x38] sm:$0xf]
    %v120 = vld [vmem:[#allocation3 + $0x3c] sm:$0xf]
    %v137 = vunpack.c.l.b16 %v105
    %v138 = vunpack.c.l.b16 %v106
    %v139 = vunpack.c.l.b16 %v107
    %v140 = vunpack.c.l.b16 %v108
    %v141 = vunpack.c.l.b16 %v109
    %v142 = vunpack.c.l.b16 %v110
    %v143 = vunpack.c.l.b16 %v111
    %v144 = vunpack.c.l.b16 %v112
    %v145 = vunpack.c.l.b16 %v113
    %v146 = vunpack.c.l.b16 %v114
    %v147 = vunpack.c.l.b16 %v115
    %v148 = vunpack.c.l.b16 %v116
    %v149 = vunpack.c.l.b16 %v117
    %v150 = vunpack.c.l.b16 %v118
    %v151 = vunpack.c.l.b16 %v119
    %v152 = vunpack.c.l.b16 %v120
    %v153 = vpack.c.b16 %v138, %v137
    %v154 = vpack.c.b16 %v140, %v139
    %v155 = vpack.c.b16 %v142, %v141
    %v156 = vpack.c.b16 %v144, %v143
    %v157 = vpack.c.b16 %v146, %v145
    %v158 = vpack.c.b16 %v148, %v147
    %v159 = vpack.c.b16 %v150, %v149
    %v160 = vpack.c.b16 %v152, %v151
    %169 = vmatprep.subr.bf16.mxu0 0
    %170 = vmatpush1.bf16.msra.mxu0 %v153
    %171 = vmatprep.subr.bf16.mxu0 0
    %172 = vmatpush1.bf16.msra.mxu0 %v154
    %173 = vmatprep.subr.bf16.mxu0 0
    %174 = vmatpush1.bf16.msra.mxu0 %v155
    %175 = vmatprep.subr.bf16.mxu0 0
    %176 = vmatpush1.bf16.msra.mxu0 %v156
    %177 = vmatprep.subr.bf16.mxu0 0
    %178 = vmatpush1.bf16.msra.mxu0 %v157
    %179 = vmatprep.subr.bf16.mxu0 0
    %180 = vmatpush1.bf16.msra.mxu0 %v158
    %181 = vmatprep.subr.bf16.mxu0 0
    %182 = vmatpush1.bf16.msra.mxu0 %v159
    %183 = vmatprep.subr.bf16.mxu0 0
    %184 = vmatpush1.bf16.msra.mxu0 %v160
    %185 = vmatprep.subr.bf16.mxu0 0
    %186 = vmatpush1.bf16.msra.mxu0 0
    %187 = vmatprep.subr.bf16.mxu0 0
    %188 = vmatpush1.bf16.msra.mxu0 0
    %189 = vmatprep.subr.bf16.mxu0 0
    %190 = vmatpush1.bf16.msra.mxu0 0
    %191 = vmatprep.subr.bf16.mxu0 0
    %192 = vmatpush1.bf16.msra.mxu0 0
    %193 = vmatprep.subr.bf16.mxu0 0
    %194 = vmatpush1.bf16.msra.mxu0 0
    %195 = vmatprep.subr.bf16.mxu0 0
    %196 = vmatpush1.bf16.msra.mxu0 0
    %197 = vmatprep.subr.bf16.mxu0 0
    %198 = vmatpush1.bf16.msra.mxu0 0
    %199 = vmatprep.subr.bf16.mxu0 0
    %200 = vmatpush1.bf16.msra.mxu0 0
    %201 = vmatprep.mubr.bf16.mxu0 0
    %202 = vmatmul.mubr.bf16.gmra.mrb[0].mxu0 %v97
    %v203 = vpop.f32.mrb[0].mxu0
    %v204 = vadd.f32 0.0, %v203
    %v205 = vpop.f32.mrb[0].mxu0
    %v206 = vpop.f32.mrb[0].mxu0
    %v207 = vadd.f32 0.0, %v206
    %v208 = vpop.f32.mrb[0].mxu0
    %209 = vmatprep.mubr.bf16.mxu0 0
    %210 = vmatmul.mubr.bf16.gmra.mrb[0].mxu0 %v98
    %v211 = vpop.f32.mrb[0].mxu0
    %v212 = vadd.f32 0.0, %v211
    %v213 = vpop.f32.mrb[0].mxu0
    %v214 = vpop.f32.mrb[0].mxu0
    %v215 = vadd.f32 0.0, %v214
    %v216 = vpop.f32.mrb[0].mxu0
    %217 = vmatprep.mubr.bf16.mxu0 0
    %218 = vmatmul.mubr.bf16.gmra.mrb[0].mxu0 %v99
    %v219 = vpop.f32.mrb[0].mxu0
    %v220 = vadd.f32 0.0, %v219
    %v221 = vpop.f32.mrb[0].mxu0
    %v222 = vpop.f32.mrb[0].mxu0
    %v223 = vadd.f32 0.0, %v222
    %v224 = vpop.f32.mrb[0].mxu0
    %225 = vmatprep.mubr.bf16.mxu0 0
    %226 = vmatmul.mubr.bf16.gmra.mrb[0].mxu0 %v100
    %v227 = vpop.f32.mrb[0].mxu0
    %v228 = vadd.f32 0.0, %v227
    %v229 = vpop.f32.mrb[0].mxu0
    %v230 = vpop.f32.mrb[0].mxu0
    %v231 = vadd.f32 0.0, %v230
    %v232 = vpop.f32.mrb[0].mxu0
    %233 = vmatprep.mubr.bf16.mxu0 0
    %234 = vmatmul.mubr.bf16.gmra.mrb[0].mxu0 %v101
    %v235 = vpop.f32.mrb[0].mxu0
    %v236 = vadd.f32 0.0, %v235
    %v237 = vpop.f32.mrb[0].mxu0
    %v238 = vpop.f32.mrb[0].mxu0
    %v239 = vadd.f32 0.0, %v238
    %v240 = vpop.f32.mrb[0].mxu0
    %241 = vmatprep.mubr.bf16.mxu0 0
    %242 = vmatmul.mubr.bf16.gmra.mrb[0].mxu0 %v102
    %v243 = vpop.f32.mrb[0].mxu0
    %v244 = vadd.f32 0.0, %v243
    %v245 = vpop.f32.mrb[0].mxu0
    %v246 = vpop.f32.mrb[0].mxu0
    %v247 = vadd.f32 0.0, %v246
    %v248 = vpop.f32.mrb[0].mxu0
    %249 = vmatprep.mubr.bf16.mxu0 0
    %250 = vmatmul.mubr.bf16.gmra.mrb[0].mxu0 %v103
    %v251 = vpop.f32.mrb[0].mxu0
    %v252 = vadd.f32 0.0, %v251
    %v253 = vpop.f32.mrb[0].mxu0
    %v254 = vpop.f32.mrb[0].mxu0
    %v255 = vadd.f32 0.0, %v254
    %v256 = vpop.f32.mrb[0].mxu0
    %257 = vmatprep.mubr.bf16.mxu0 0
    %258 = vmatmul.mubr.bf16.gmra.mrb[0].mxu0 %v104
    %v259 = vpop.f32.mrb[0].mxu0
    %v260 = vadd.f32 0.0, %v259
    %v261 = vpop.f32.mrb[0].mxu0
    %v262 = vpop.f32.mrb[0].mxu0
    %v263 = vadd.f32 0.0, %v262
    %v264 = vpop.f32.mrb[0].mxu0
    %265 = vdwg.mxu0
    %v266 = vadd.f32 %v204, %v207
    %v267 = vadd.f32 %v266, %v212
    %v268 = vadd.f32 %v267, %v215
    %v269 = vadd.f32 %v268, %v220
    %v270 = vadd.f32 %v269, %v223
    %v271 = vadd.f32 %v270, %v228
    %v272 = vadd.f32 %v271, %v231
    %v273 = vadd.f32 %v272, %v236
    %v274 = vadd.f32 %v273, %v239
    %v275 = vadd.f32 %v274, %v244
    %v276 = vadd.f32 %v275, %v247
    %v277 = vadd.f32 %v276, %v252
    %v278 = vadd.f32 %v277, %v255
    %v279 = vadd.f32 %v278, %v260
    %v280 = vadd.f32 %v279, %v263
    %v281 = vrot.slane %v280, 4
    %v282 = vadd.f32 %v280, %v281
    %v283 = vrot.slane %v282, 2
    %v284 = vadd.f32 %v282, %v283
    %v285 = vrot.slane %v284, 1
    %v286 = vadd.f32 %v284, %v285
    %v287 = vrcp.pop 128.0
    %v288 = vmul.f32 %v286, %v287
    %v289 = vsub.f32 %v204, %v288
    %v290 = vsub.f32 %v207, %v288
    %v291 = vsub.f32 %v212, %v288
    %v292 = vsub.f32 %v215, %v288
    %v293 = vsub.f32 %v220, %v288
    %v294 = vsub.f32 %v223, %v288
    %v295 = vsub.f32 %v228, %v288
    %v296 = vsub.f32 %v231, %v288
    %v297 = vsub.f32 %v236, %v288
    %v298 = vsub.f32 %v239, %v288
    %v299 = vsub.f32 %v244, %v288
    %v300 = vsub.f32 %v247, %v288
    %v301 = vsub.f32 %v252, %v288
    %v302 = vsub.f32 %v255, %v288
    %v303 = vsub.f32 %v260, %v288
    %v304 = vsub.f32 %v263, %v288
    %v305 = vmul.f32 %v289, %v289
    %v306 = vmul.f32 %v290, %v290
    %v307 = vmul.f32 %v291, %v291
    %v308 = vmul.f32 %v292, %v292
    %v309 = vmul.f32 %v293, %v293
    %v310 = vmul.f32 %v294, %v294
    %v311 = vmul.f32 %v295, %v295
    %v312 = vmul.f32 %v296, %v296
    %v313 = vmul.f32 %v297, %v297
    %v314 = vmul.f32 %v298, %v298
    %v315 = vmul.f32 %v299, %v299
    %v316 = vmul.f32 %v300, %v300
    %v317 = vmul.f32 %v301, %v301
    %v318 = vmul.f32 %v302, %v302
    %v319 = vmul.f32 %v303, %v303
    %v320 = vmul.f32 %v304, %v304
    %v321 = vadd.f32 %v305, %v306
    %v322 = vadd.f32 %v321, %v307
    %v323 = vadd.f32 %v322, %v308
    %v324 = vadd.f32 %v323, %v309
    %v325 = vadd.f32 %v324, %v310
    %v326 = vadd.f32 %v325, %v311
    %v327 = vadd.f32 %v326, %v312
    %v328 = vadd.f32 %v327, %v313
    %v329 = vadd.f32 %v328, %v314
    %v330 = vadd.f32 %v329, %v315
    %v331 = vadd.f32 %v330, %v316
    %v332 = vadd.f32 %v331, %v317
    %v333 = vadd.f32 %v332, %v318
    %v334 = vadd.f32 %v333, %v319
    %v335 = vadd.f32 %v334, %v320
    %v336 = vrot.slane %v335, 4
    %v337 = vadd.f32 %v335, %v336
    %v338 = vrot.slane %v337, 2
    %v339 = vadd.f32 %v337, %v338
    %v340 = vrot.slane %v339, 1
    %v341 = vadd.f32 %v339, %v340
    %v342 = vmul.f32 %v341, %v287
    %v343 = vld [vmem:[%s2] sm:$0x1]
    %v344 = vadd.f32 %v342, 1e-05
    %v345 = vrsqrt.pop %v344
    %v346 = vmul.f32 %v343, %v345
    %v347 = vlaneseq
    %v348 = vshrl.u32 %v347, 7
    %v349 = vsub.s32 0, %v348
    %v350 = vrot.slane %v346, %v349
    %v351 = vmul.f32 %v289, %v350
    %v352 = vmul.f32 %v290, %v350
    %v353 = vmul.f32 %v291, %v350
    %v354 = vmul.f32 %v292, %v350
    %v355 = vmul.f32 %v293, %v350
    %v356 = vmul.f32 %v294, %v350
    %v357 = vmul.f32 %v295, %v350
    %v358 = vmul.f32 %v296, %v350
    %v359 = vmul.f32 %v297, %v350
    %v360 = vmul.f32 %v298, %v350
    %v361 = vmul.f32 %v299, %v350
    %v362 = vmul.f32 %v300, %v350
    %v363 = vmul.f32 %v301, %v350
    %v364 = vmul.f32 %v302, %v350
    %v365 = vmul.f32 %v303, %v350
    %v366 = vmul.f32 %v304, %v350
    %v367 = vld [vmem:[%s2 + $0x1] sm:$0x1]
    %v368 = vlaneseq
    %v369 = vshrl.u32 %v368, 7
    %v370 = vsub.s32 0, %v369
    %v371 = vrot.slane %v367, %v370
    %v372 = vadd.f32 %v351, %v371
    %v373 = vadd.f32 %v352, %v371
    %v374 = vadd.f32 %v353, %v371
    %v375 = vadd.f32 %v354, %v371
    %v376 = vadd.f32 %v355, %v371
    %v377 = vadd.f32 %v356, %v371
    %v378 = vadd.f32 %v357, %v371
    %v379 = vadd.f32 %v358, %v371
    %v380 = vadd.f32 %v359, %v371
    %v381 = vadd.f32 %v360, %v371
    %v382 = vadd.f32 %v361, %v371
    %v383 = vadd.f32 %v362, %v371
    %v384 = vadd.f32 %v363, %v371
    %v385 = vadd.f32 %v364, %v371
    %v386 = vadd.f32 %v365, %v371
    %v387 = vadd.f32 %v366, %v371
    %v388 = vmax.f32 %v372, 0.0
    %v389 = vmax.f32 %v373, 0.0
    %v390 = vmax.f32 %v374, 0.0
    %v391 = vmax.f32 %v375, 0.0
    %v392 = vmax.f32 %v376, 0.0
    %v393 = vmax.f32 %v377, 0.0
    %v394 = vmax.f32 %v378, 0.0
    %v395 = vmax.f32 %v379, 0.0
    %v396 = vmax.f32 %v380, 0.0
    %v397 = vmax.f32 %v381, 0.0
    %v398 = vmax.f32 %v382, 0.0
    %v399 = vmax.f32 %v383, 0.0
    %v400 = vmax.f32 %v384, 0.0
    %v401 = vmax.f32 %v385, 0.0
    %v402 = vmax.f32 %v386, 0.0
    %v403 = vmax.f32 %v387, 0.0
    %v404 = vpack.c.bf16 %v389, %v388
    %v405 = vpack.c.bf16 %v391, %v390
    %v406 = vpack.c.bf16 %v393, %v392
    %v407 = vpack.c.bf16 %v395, %v394
    %v408 = vpack.c.bf16 %v397, %v396
    %v409 = vpack.c.bf16 %v399, %v398
    %v410 = vpack.c.bf16 %v401, %v400
    %v411 = vpack.c.bf16 %v403, %v402
    %v412 = vld [vmem:[#allocation3 + $0x40] sm:$0xf]
    %v413 = vld [vmem:[#allocation3 + $0x44] sm:$0xf]
    %v414 = vld [vmem:[#allocation3 + $0x48] sm:$0xf]
    %v415 = vld [vmem:[#allocation3 + $0x4c] sm:$0xf]
    %v416 = vld [vmem:[#allocation3 + $0x50] sm:$0xf]
    %v417 = vld [vmem:[#allocation3 + $0x54] sm:$0xf]
    %v418 = vld [vmem:[#allocation3 + $0x58] sm:$0xf]
    %v419 = vld [vmem:[#allocation3 + $0x5c] sm:$0xf]
    %v420 = vld [vmem:[#allocation3 + $0x60] sm:$0xf]
    %v421 = vld [vmem:[#allocation3 + $0x64] sm:$0xf]
    %v422 = vld [vmem:[#allocation3 + $0x68] sm:$0xf]
    %v423 = vld [vmem:[#allocation3 + $0x6c] sm:$0xf]
    %v424 = vld [vmem:[#allocation3 + $0x70] sm:$0xf]
    %v425 = vld [vmem:[#allocation3 + $0x74] sm:$0xf]
    %v426 = vld [vmem:[#allocation3 + $0x78] sm:$0xf]
    %v427 = vld [vmem:[#allocation3 + $0x7c] sm:$0xf]
    %v444 = vunpack.c.l.b16 %v412
    %v445 = vunpack.c.l.b16 %v413
    %v446 = vunpack.c.l.b16 %v414
    %v447 = vunpack.c.l.b16 %v415
    %v448 = vunpack.c.l.b16 %v416
    %v449 = vunpack.c.l.b16 %v417
    %v450 = vunpack.c.l.b16 %v418
    %v451 = vunpack.c.l.b16 %v419
    %v452 = vunpack.c.l.b16 %v420
    %v453 = vunpack.c.l.b16 %v421
    %v454 = vunpack.c.l.b16 %v422
    %v455 = vunpack.c.l.b16 %v423
    %v456 = vunpack.c.l.b16 %v424
    %v457 = vunpack.c.l.b16 %v425
    %v458 = vunpack.c.l.b16 %v426
    %v459 = vunpack.c.l.b16 %v427
    %v460 = vpack.c.b16 %v445, %v444
    %v461 = vpack.c.b16 %v447, %v446
    %v462 = vpack.c.b16 %v449, %v448
    %v463 = vpack.c.b16 %v451, %v450
    %v464 = vpack.c.b16 %v453, %v452
    %v465 = vpack.c.b16 %v455, %v454
    %v466 = vpack.c.b16 %v457, %v456
    %v467 = vpack.c.b16 %v459, %v458
    %476 = vmatprep.subr.bf16.mxu0 0
    %477 = vmatpush1.bf16.msra.mxu0 %v460
    %478 = vmatprep.subr.bf16.mxu0 0
    %479 = vmatpush1.bf16.msra.mxu0 %v461
    %480 = vmatprep.subr.bf16.mxu0 0
    %481 = vmatpush1.bf16.msra.mxu0 %v462
    %482 = vmatprep.subr.bf16.mxu0 0
    %483 = vmatpush1.bf16.msra.mxu0 %v463
    %484 = vmatprep.subr.bf16.mxu0 0
    %485 = vmatpush1.bf16.msra.mxu0 %v464
    %486 = vmatprep.subr.bf16.mxu0 0
    %487 = vmatpush1.bf16.msra.mxu0 %v465
    %488 = vmatprep.subr.bf16.mxu0 0
    %489 = vmatpush1.bf16.msra.mxu0 %v466
    %490 = vmatprep.subr.bf16.mxu0 0
    %491 = vmatpush1.bf16.msra.mxu0 %v467
    %492 = vmatprep.subr.bf16.mxu0 0
    %493 = vmatpush1.bf16.msra.mxu0 0
    %494 = vmatprep.subr.bf16.mxu0 0
    %495 = vmatpush1.bf16.msra.mxu0 0
    %496 = vmatprep.subr.bf16.mxu0 0
    %497 = vmatpush1.bf16.msra.mxu0 0
    %498 = vmatprep.subr.bf16.mxu0 0
    %499 = vmatpush1.bf16.msra.mxu0 0
    %500 = vmatprep.subr.bf16.mxu0 0
    %501 = vmatpush1.bf16.msra.mxu0 0
    %502 = vmatprep.subr.bf16.mxu0 0
    %503 = vmatpush1.bf16.msra.mxu0 0
    %504 = vmatprep.subr.bf16.mxu0 0
    %505 = vmatpush1.bf16.msra.mxu0 0
    %506 = vmatprep.subr.bf16.mxu0 0
    %507 = vmatpush1.bf16.msra.mxu0 0
    %508 = vmatprep.mubr.bf16.mxu0 0
    %509 = vmatmul.mubr.bf16.gmra.mrb[0].mxu0 %v404
    %v510 = vpop.f32.mrb[0].mxu0
    %v511 = vadd.f32 0.0, %v510
    %v512 = vpop.f32.mrb[0].mxu0
    %v513 = vpop.f32.mrb[0].mxu0
    %v514 = vadd.f32 0.0, %v513
    %v515 = vpop.f32.mrb[0].mxu0
    %516 = vmatprep.mubr.bf16.mxu0 0
    %517 = vmatmul.mubr.bf16.gmra.mrb[0].mxu0 %v405
    %v518 = vpop.f32.mrb[0].mxu0
    %v519 = vadd.f32 0.0, %v518
    %v520 = vpop.f32.mrb[0].mxu0
    %v521 = vpop.f32.mrb[0].mxu0
    %v522 = vadd.f32 0.0, %v521
    %v523 = vpop.f32.mrb[0].mxu0
    %524 = vmatprep.mubr.bf16.mxu0 0
    %525 = vmatmul.mubr.bf16.gmra.mrb[0].mxu0 %v406
    %v526 = vpop.f32.mrb[0].mxu0
    %v527 = vadd.f32 0.0, %v526
    %v528 = vpop.f32.mrb[0].mxu0
    %v529 = vpop.f32.mrb[0].mxu0
    %v530 = vadd.f32 0.0, %v529
    %v531 = vpop.f32.mrb[0].mxu0
    %532 = vmatprep.mubr.bf16.mxu0 0
    %533 = vmatmul.mubr.bf16.gmra.mrb[0].mxu0 %v407
    %v534 = vpop.f32.mrb[0].mxu0
    %v535 = vadd.f32 0.0, %v534
    %v536 = vpop.f32.mrb[0].mxu0
    %v537 = vpop.f32.mrb[0].mxu0
    %v538 = vadd.f32 0.0, %v537
    %v539 = vpop.f32.mrb[0].mxu0
    %540 = vmatprep.mubr.bf16.mxu0 0
    %541 = vmatmul.mubr.bf16.gmra.mrb[0].mxu0 %v408
    %v542 = vpop.f32.mrb[0].mxu0
    %v543 = vadd.f32 0.0, %v542
    %v544 = vpop.f32.mrb[0].mxu0
    %v545 = vpop.f32.mrb[0].mxu0
    %v546 = vadd.f32 0.0, %v545
    %v547 = vpop.f32.mrb[0].mxu0
    %548 = vmatprep.mubr.bf16.mxu0 0
    %549 = vmatmul.mubr.bf16.gmra.mrb[0].mxu0 %v409
    %v550 = vpop.f32.mrb[0].mxu0
    %v551 = vadd.f32 0.0, %v550
    %v552 = vpop.f32.mrb[0].mxu0
    %v553 = vpop.f32.mrb[0].mxu0
    %v554 = vadd.f32 0.0, %v553
    %v555 = vpop.f32.mrb[0].mxu0
    %556 = vmatprep.mubr.bf16.mxu0 0
    %557 = vmatmul.mubr.bf16.gmra.mrb[0].mxu0 %v410
    %v558 = vpop.f32.mrb[0].mxu0
    %v559 = vadd.f32 0.0, %v558
    %v560 = vpop.f32.mrb[0].mxu0
    %v561 = vpop.f32.mrb[0].mxu0
    %v562 = vadd.f32 0.0, %v561
    %v563 = vpop.f32.mrb[0].mxu0
    %564 = vmatprep.mubr.bf16.mxu0 0
    %565 = vmatmul.mubr.bf16.gmra.mrb[0].mxu0 %v411
    %v566 = vpop.f32.mrb[0].mxu0
    %v567 = vadd.f32 0.0, %v566
    %v568 = vpop.f32.mrb[0].mxu0
    %v569 = vpop.f32.mrb[0].mxu0
    %v570 = vadd.f32 0.0, %v569
    %v571 = vpop.f32.mrb[0].mxu0
    %572 = vdwg.mxu0
    %v573 = vadd.f32 %v511, %v514
    %v574 = vadd.f32 %v573, %v519
    %v575 = vadd.f32 %v574, %v522
    %v576 = vadd.f32 %v575, %v527
    %v577 = vadd.f32 %v576, %v530
    %v578 = vadd.f32 %v577, %v535
    %v579 = vadd.f32 %v578, %v538
    %v580 = vadd.f32 %v579, %v543
    %v581 = vadd.f32 %v580, %v546
    %v582 = vadd.f32 %v581, %v551
    %v583 = vadd.f32 %v582, %v554
    %v584 = vadd.f32 %v583, %v559
    %v585 = vadd.f32 %v584, %v562
    %v586 = vadd.f32 %v585, %v567
    %v587 = vadd.f32 %v586, %v570
    %v588 = vrot.slane %v587, 4
    %v589 = vadd.f32 %v587, %v588
    %v590 = vrot.slane %v589, 2
    %v591 = vadd.f32 %v589, %v590
    %v592 = vrot.slane %v591, 1
    %v593 = vadd.f32 %v591, %v592
    %v594 = vmul.f32 %v593, %v287
    %v595 = vsub.f32 %v511, %v594
    %v596 = vsub.f32 %v514, %v594
    %v597 = vsub.f32 %v519, %v594
    %v598 = vsub.f32 %v522, %v594
    %v599 = vsub.f32 %v527, %v594
    %v600 = vsub.f32 %v530, %v594
    %v601 = vsub.f32 %v535, %v594
    %v602 = vsub.f32 %v538, %v594
    %v603 = vsub.f32 %v543, %v594
    %v604 = vsub.f32 %v546, %v594
    %v605 = vsub.f32 %v551, %v594
    %v606 = vsub.f32 %v554, %v594
    %v607 = vsub.f32 %v559, %v594
    %v608 = vsub.f32 %v562, %v594
    %v609 = vsub.f32 %v567, %v594
    %v610 = vsub.f32 %v570, %v594
    %v611 = vmul.f32 %v595, %v595
    %v612 = vmul.f32 %v596, %v596
    %v613 = vmul.f32 %v597, %v597
    %v614 = vmul.f32 %v598, %v598
    %v615 = vmul.f32 %v599, %v599
    %v616 = vmul.f32 %v600, %v600
    %v617 = vmul.f32 %v601, %v601
    %v618 = vmul.f32 %v602, %v602
    %v619 = vmul.f32 %v603, %v603
    %v620 = vmul.f32 %v604, %v604
    %v621 = vmul.f32 %v605, %v605
    %v622 = vmul.f32 %v606, %v606
    %v623 = vmul.f32 %v607, %v607
    %v624 = vmul.f32 %v608, %v608
    %v625 = vmul.f32 %v609, %v609
    %v626 = vmul.f32 %v610, %v610
    %v627 = vadd.f32 %v611, %v612
    %v628 = vadd.f32 %v627, %v613
    %v629 = vadd.f32 %v628, %v614
    %v630 = vadd.f32 %v629, %v615
    %v631 = vadd.f32 %v630, %v616
    %v632 = vadd.f32 %v631, %v617
    %v633 = vadd.f32 %v632, %v618
    %v634 = vadd.f32 %v633, %v619
    %v635 = vadd.f32 %v634, %v620
    %v636 = vadd.f32 %v635, %v621
    %v637 = vadd.f32 %v636, %v622
    %v638 = vadd.f32 %v637, %v623
    %v639 = vadd.f32 %v638, %v624
    %v640 = vadd.f32 %v639, %v625
    %v641 = vadd.f32 %v640, %v626
    %v642 = vrot.slane %v641, 4
    %v643 = vadd.f32 %v641, %v642
    %v644 = vrot.slane %v643, 2
    %v645 = vadd.f32 %v643, %v644
    %v646 = vrot.slane %v645, 1
    %v647 = vadd.f32 %v645, %v646
    %v648 = vmul.f32 %v647, %v287
    %v649 = vld [vmem:[%s2 + $0x2] sm:$0x1]
    %v650 = vadd.f32 %v648, 1e-05
    %v651 = vrsqrt.pop %v650
    %v652 = vmul.f32 %v649, %v651
    %v653 = vlaneseq
    %v654 = vshrl.u32 %v653, 7
    %v655 = vsub.s32 0, %v654
    %v656 = vrot.slane %v652, %v655
    %v657 = vmul.f32 %v595, %v656
    %v658 = vmul.f32 %v596, %v656
    %v659 = vmul.f32 %v597, %v656
    %v660 = vmul.f32 %v598, %v656
    %v661 = vmul.f32 %v599, %v656
    %v662 = vmul.f32 %v600, %v656
    %v663 = vmul.f32 %v601, %v656
    %v664 = vmul.f32 %v602, %v656
    %v665 = vmul.f32 %v603, %v656
    %v666 = vmul.f32 %v604, %v656
    %v667 = vmul.f32 %v605, %v656
    %v668 = vmul.f32 %v606, %v656
    %v669 = vmul.f32 %v607, %v656
    %v670 = vmul.f32 %v608, %v656
    %v671 = vmul.f32 %v609, %v656
    %v672 = vmul.f32 %v610, %v656
    %v673 = vld [vmem:[%s2 + $0x3] sm:$0x1]
    %v674 = vlaneseq
    %v675 = vshrl.u32 %v674, 7
    %v676 = vsub.s32 0, %v675
    %v677 = vrot.slane %v673, %v676
    %v678 = vadd.f32 %v657, %v677
    %v679 = vadd.f32 %v658, %v677
    %v680 = vadd.f32 %v659, %v677
    %v681 = vadd.f32 %v660, %v677
    %v682 = vadd.f32 %v661, %v677
    %v683 = vadd.f32 %v662, %v677
    %v684 = vadd.f32 %v663, %v677
    %v685 = vadd.f32 %v664, %v677
    %v686 = vadd.f32 %v665, %v677
    %v687 = vadd.f32 %v666, %v677
    %v688 = vadd.f32 %v667, %v677
    %v689 = vadd.f32 %v668, %v677
    %v690 = vadd.f32 %v669, %v677
    %v691 = vadd.f32 %v670, %v677
    %v692 = vadd.f32 %v671, %v677
    %v693 = vadd.f32 %v672, %v677
    %v694 = vmax.f32 %v678, 0.0
    %v695 = vmax.f32 %v679, 0.0
    %v696 = vmax.f32 %v680, 0.0
    %v697 = vmax.f32 %v681, 0.0
    %v698 = vmax.f32 %v682, 0.0
    %v699 = vmax.f32 %v683, 0.0
    %v700 = vmax.f32 %v684, 0.0
    %v701 = vmax.f32 %v685, 0.0
    %v702 = vmax.f32 %v686, 0.0
    %v703 = vmax.f32 %v687, 0.0
    %v704 = vmax.f32 %v688, 0.0
    %v705 = vmax.f32 %v689, 0.0
    %v706 = vmax.f32 %v690, 0.0
    %v707 = vmax.f32 %v691, 0.0
    %v708 = vmax.f32 %v692, 0.0
    %v709 = vmax.f32 %v693, 0.0
    %v710 = vpack.c.bf16 %v695, %v694
    %v711 = vpack.c.bf16 %v697, %v696
    %v712 = vpack.c.bf16 %v699, %v698
    %v713 = vpack.c.bf16 %v701, %v700
    %v714 = vpack.c.bf16 %v703, %v702
    %v715 = vpack.c.bf16 %v705, %v704
    %v716 = vpack.c.bf16 %v707, %v706
    %v717 = vpack.c.bf16 %v709, %v708
    %v718 = vld [vmem:[#allocation3 + $0x80] sm:$0xf]
    %v719 = vld [vmem:[#allocation3 + $0x84] sm:$0xf]
    %v720 = vld [vmem:[#allocation3 + $0x88] sm:$0xf]
    %v721 = vld [vmem:[#allocation3 + $0x8c] sm:$0xf]
    %v722 = vld [vmem:[#allocation3 + $0x90] sm:$0xf]
    %v723 = vld [vmem:[#allocation3 + $0x94] sm:$0xf]
    %v724 = vld [vmem:[#allocation3 + $0x98] sm:$0xf]
    %v725 = vld [vmem:[#allocation3 + $0x9c] sm:$0xf]
    %v726 = vld [vmem:[#allocation3 + $0xa0] sm:$0xf]
    %v727 = vld [vmem:[#allocation3 + $0xa4] sm:$0xf]
    %v728 = vld [vmem:[#allocation3 + $0xa8] sm:$0xf]
    %v729 = vld [vmem:[#allocation3 + $0xac] sm:$0xf]
    %v730 = vld [vmem:[#allocation3 + $0xb0] sm:$0xf]
    %v731 = vld [vmem:[#allocation3 + $0xb4] sm:$0xf]
    %v732 = vld [vmem:[#allocation3 + $0xb8] sm:$0xf]
    %v733 = vld [vmem:[#allocation3 + $0xbc] sm:$0xf]
    %v734 = vld [vmem:[%s2 + $0x4] sm:$0x1]
    %v735 = vlaneseq
    %v736 = vshrl.u32 %v735, 7
    %v737 = vsub.s32 0, %v736
    %v738 = vrot.slane %v734, %v737
    %v755 = vunpack.c.l.b16 %v718
    %v756 = vunpack.c.l.b16 %v719
    %v757 = vunpack.c.l.b16 %v720
    %v758 = vunpack.c.l.b16 %v721
    %v759 = vunpack.c.l.b16 %v722
    %v760 = vunpack.c.l.b16 %v723
    %v761 = vunpack.c.l.b16 %v724
    %v762 = vunpack.c.l.b16 %v725
    %v763 = vunpack.c.l.b16 %v726
    %v764 = vunpack.c.l.b16 %v727
    %v765 = vunpack.c.l.b16 %v728
    %v766 = vunpack.c.l.b16 %v729
    %v767 = vunpack.c.l.b16 %v730
    %v768 = vunpack.c.l.b16 %v731
    %v769 = vunpack.c.l.b16 %v732
    %v770 = vunpack.c.l.b16 %v733
    %v771 = vpack.c.b16 %v756, %v755
    %v772 = vpack.c.b16 %v758, %v757
    %v773 = vpack.c.b16 %v760, %v759
    %v774 = vpack.c.b16 %v762, %v761
    %v775 = vpack.c.b16 %v764, %v763
    %v776 = vpack.c.b16 %v766, %v765
    %v777 = vpack.c.b16 %v768, %v767
    %v778 = vpack.c.b16 %v770, %v769
    %787 = vmatprep.subr.bf16.mxu0 0
    %788 = vmatpush1.bf16.msra.mxu0 %v771
    %789 = vmatprep.subr.bf16.mxu0 0
    %790 = vmatpush1.bf16.msra.mxu0 %v772
    %791 = vmatprep.subr.bf16.mxu0 0
    %792 = vmatpush1.bf16.msra.mxu0 %v773
    %793 = vmatprep.subr.bf16.mxu0 0
    %794 = vmatpush1.bf16.msra.mxu0 %v774
    %795 = vmatprep.subr.bf16.mxu0 0
    %796 = vmatpush1.bf16.msra.mxu0 %v775
    %797 = vmatprep.subr.bf16.mxu0 0
    %798 = vmatpush1.bf16.msra.mxu0 %v776
    %799 = vmatprep.subr.bf16.mxu0 0
    %800 = vmatpush1.bf16.msra.mxu0 %v777
    %801 = vmatprep.subr.bf16.mxu0 0
    %802 = vmatpush1.bf16.msra.mxu0 %v778
    %803 = vmatprep.subr.bf16.mxu0 0
    %804 = vmatpush1.bf16.msra.mxu0 0
    %805 = vmatprep.subr.bf16.mxu0 0
    %806 = vmatpush1.bf16.msra.mxu0 0
    %807 = vmatprep.subr.bf16.mxu0 0
    %808 = vmatpush1.bf16.msra.mxu0 0
    %809 = vmatprep.subr.bf16.mxu0 0
    %810 = vmatpush1.bf16.msra.mxu0 0
    %811 = vmatprep.subr.bf16.mxu0 0
    %812 = vmatpush1.bf16.msra.mxu0 0
    %813 = vmatprep.subr.bf16.mxu0 0
    %814 = vmatpush1.bf16.msra.mxu0 0
    %815 = vmatprep.subr.bf16.mxu0 0
    %816 = vmatpush1.bf16.msra.mxu0 0
    %817 = vmatprep.subr.bf16.mxu0 0
    %818 = vmatpush1.bf16.msra.mxu0 0
    %819 = vmatprep.mubr.bf16.mxu0 0
    %820 = vmatmul.mubr.bf16.gmra.mrb[0].mxu0 %v710
    %v821 = vpop.f32.mrb[0].mxu0
    %v822 = vadd.f32 %v738, %v821
    %v823 = vpop.f32.mrb[0].mxu0
    %v824 = vpop.f32.mrb[0].mxu0
    %v825 = vadd.f32 %v738, %v824
    %v826 = vpop.f32.mrb[0].mxu0
    %827 = vmatprep.mubr.bf16.mxu0 0
    %828 = vmatmul.mubr.bf16.gmra.mrb[0].mxu0 %v711
    %v829 = vpop.f32.mrb[0].mxu0
    %v830 = vadd.f32 %v738, %v829
    %v831 = vpop.f32.mrb[0].mxu0
    %v832 = vpop.f32.mrb[0].mxu0
    %v833 = vadd.f32 %v738, %v832
    %v834 = vpop.f32.mrb[0].mxu0
    %835 = vmatprep.mubr.bf16.mxu0 0
    %836 = vmatmul.mubr.bf16.gmra.mrb[0].mxu0 %v712
    %v837 = vpop.f32.mrb[0].mxu0
    %v838 = vadd.f32 %v738, %v837
    %v839 = vpop.f32.mrb[0].mxu0
    %v840 = vpop.f32.mrb[0].mxu0
    %v841 = vadd.f32 %v738, %v840
    %v842 = vpop.f32.mrb[0].mxu0
    %843 = vmatprep.mubr.bf16.mxu0 0
    %844 = vmatmul.mubr.bf16.gmra.mrb[0].mxu0 %v713
    %v845 = vpop.f32.mrb[0].mxu0
    %v846 = vadd.f32 %v738, %v845
    %v847 = vpop.f32.mrb[0].mxu0
    %v848 = vpop.f32.mrb[0].mxu0
    %v849 = vadd.f32 %v738, %v848
    %v850 = vpop.f32.mrb[0].mxu0
    %851 = vmatprep.mubr.bf16.mxu0 0
    %852 = vmatmul.mubr.bf16.gmra.mrb[0].mxu0 %v714
    %v853 = vpop.f32.mrb[0].mxu0
    %v854 = vadd.f32 %v738, %v853
    %v855 = vpop.f32.mrb[0].mxu0
    %v856 = vpop.f32.mrb[0].mxu0
    %v857 = vadd.f32 %v738, %v856
    %v858 = vpop.f32.mrb[0].mxu0
    %859 = vmatprep.mubr.bf16.mxu0 0
    %860 = vmatmul.mubr.bf16.gmra.mrb[0].mxu0 %v715
    %v861 = vpop.f32.mrb[0].mxu0
    %v862 = vadd.f32 %v738, %v861
    %v863 = vpop.f32.mrb[0].mxu0
    %v864 = vpop.f32.mrb[0].mxu0
    %v865 = vadd.f32 %v738, %v864
    %v866 = vpop.f32.mrb[0].mxu0
    %867 = vmatprep.mubr.bf16.mxu0 0
    %868 = vmatmul.mubr.bf16.gmra.mrb[0].mxu0 %v716
    %v869 = vpop.f32.mrb[0].mxu0
    %v870 = vadd.f32 %v738, %v869
    %v871 = vpop.f32.mrb[0].mxu0
    %v872 = vpop.f32.mrb[0].mxu0
    %v873 = vadd.f32 %v738, %v872
    %v874 = vpop.f32.mrb[0].mxu0
    %875 = vmatprep.mubr.bf16.mxu0 0
    %876 = vmatmul.mubr.bf16.gmra.mrb[0].mxu0 %v717
    %v877 = vpop.f32.mrb[0].mxu0
    %v878 = vadd.f32 %v738, %v877
    %v879 = vpop.f32.mrb[0].mxu0
    %v880 = vpop.f32.mrb[0].mxu0
    %v881 = vadd.f32 %v738, %v880
    %v882 = vpop.f32.mrb[0].mxu0
    %883 = vdwg.mxu0
    %v884 = vpack.c.bf16 %v825, %v822
    %v885 = vpack.c.bf16 %v833, %v830
    %v886 = vpack.c.bf16 %v841, %v838
    %v887 = vpack.c.bf16 %v849, %v846
    %v888 = vpack.c.bf16 %v857, %v854
    %v889 = vpack.c.bf16 %v865, %v862
    %v890 = vpack.c.bf16 %v873, %v870
    %v891 = vpack.c.bf16 %v881, %v878
    %v892 = vld [vmem:[#allocation3 + $0xc0] sm:$0xf]
    %v893 = vld [vmem:[#allocation3 + $0xc4] sm:$0xf]
    %v894 = vld [vmem:[#allocation3 + $0xc8] sm:$0xf]
    %v895 = vld [vmem:[#allocation3 + $0xcc] sm:$0xf]
    %v896 = vld [vmem:[#allocation3 + $0xd0] sm:$0xf]
    %v897 = vld [vmem:[#allocation3 + $0xd4] sm:$0xf]
    %v898 = vld [vmem:[#allocation3 + $0xd8] sm:$0xf]
    %v899 = vld [vmem:[#allocation3 + $0xdc] sm:$0xf]
    %v900 = vld [vmem:[#allocation3 + $0xe0] sm:$0xf]
    %v901 = vld [vmem:[#allocation3 + $0xe4] sm:$0xf]
    %v902 = vld [vmem:[#allocation3 + $0xe8] sm:$0xf]
    %v903 = vld [vmem:[#allocation3 + $0xec] sm:$0xf]
    %v904 = vld [vmem:[#allocation3 + $0xf0] sm:$0xf]
    %v905 = vld [vmem:[#allocation3 + $0xf4] sm:$0xf]
    %v906 = vld [vmem:[#allocation3 + $0xf8] sm:$0xf]
    %v907 = vld [vmem:[#allocation3 + $0xfc] sm:$0xf]
    %v924 = vunpack.c.l.b16 %v892
    %v925 = vunpack.c.l.b16 %v893
    %v926 = vunpack.c.l.b16 %v894
    %v927 = vunpack.c.l.b16 %v895
    %v928 = vunpack.c.l.b16 %v896
    %v929 = vunpack.c.l.b16 %v897
    %v930 = vunpack.c.l.b16 %v898
    %v931 = vunpack.c.l.b16 %v899
    %v932 = vunpack.c.l.b16 %v900
    %v933 = vunpack.c.l.b16 %v901
    %v934 = vunpack.c.l.b16 %v902
    %v935 = vunpack.c.l.b16 %v903
    %v936 = vunpack.c.l.b16 %v904
    %v937 = vunpack.c.l.b16 %v905
    %v938 = vunpack.c.l.b16 %v906
    %v939 = vunpack.c.l.b16 %v907
    %v940 = vpack.c.b16 %v925, %v924
    %v941 = vpack.c.b16 %v927, %v926
    %v942 = vpack.c.b16 %v929, %v928
    %v943 = vpack.c.b16 %v931, %v930
    %v944 = vpack.c.b16 %v933, %v932
    %v945 = vpack.c.b16 %v935, %v934
    %v946 = vpack.c.b16 %v937, %v936
    %v947 = vpack.c.b16 %v939, %v938
    %956 = vmatprep.subr.bf16.mxu0 0
    %957 = vmatpush1.bf16.msra.mxu0 %v940
    %958 = vmatprep.subr.bf16.mxu0 0
    %959 = vmatpush1.bf16.msra.mxu0 %v941
    %960 = vmatprep.subr.bf16.mxu0 0
    %961 = vmatpush1.bf16.msra.mxu0 %v942
    %962 = vmatprep.subr.bf16.mxu0 0
    %963 = vmatpush1.bf16.msra.mxu0 %v943
    %964 = vmatprep.subr.bf16.mxu0 0
    %965 = vmatpush1.bf16.msra.mxu0 %v944
    %966 = vmatprep.subr.bf16.mxu0 0
    %967 = vmatpush1.bf16.msra.mxu0 %v945
    %968 = vmatprep.subr.bf16.mxu0 0
    %969 = vmatpush1.bf16.msra.mxu0 %v946
    %970 = vmatprep.subr.bf16.mxu0 0
    %971 = vmatpush1.bf16.msra.mxu0 %v947
    %972 = vmatprep.subr.bf16.mxu0 0
    %973 = vmatpush1.bf16.msra.mxu0 0
    %974 = vmatprep.subr.bf16.mxu0 0
    %975 = vmatpush1.bf16.msra.mxu0 0
    %976 = vmatprep.subr.bf16.mxu0 0
    %977 = vmatpush1.bf16.msra.mxu0 0
    %978 = vmatprep.subr.bf16.mxu0 0
    %979 = vmatpush1.bf16.msra.mxu0 0
    %980 = vmatprep.subr.bf16.mxu0 0
    %981 = vmatpush1.bf16.msra.mxu0 0
    %982 = vmatprep.subr.bf16.mxu0 0
    %983 = vmatpush1.bf16.msra.mxu0 0
    %984 = vmatprep.subr.bf16.mxu0 0
    %985 = vmatpush1.bf16.msra.mxu0 0
    %986 = vmatprep.subr.bf16.mxu0 0
    %987 = vmatpush1.bf16.msra.mxu0 0
    %988 = vmatprep.mubr.bf16.mxu0 0
    %989 = vmatmul.mubr.bf16.gmra.mrb[0].mxu0 %v884
    %v990 = vpop.f32.mrb[0].mxu0
    %v991 = vadd.f32 0.0, %v990
    %v992 = vpop.f32.mrb[0].mxu0
    %v993 = vpop.f32.mrb[0].mxu0
    %v994 = vadd.f32 0.0, %v993
    %v995 = vpop.f32.mrb[0].mxu0
    %996 = vmatprep.mubr.bf16.mxu0 0
    %997 = vmatmul.mubr.bf16.gmra.mrb[0].mxu0 %v885
    %v998 = vpop.f32.mrb[0].mxu0
    %v999 = vadd.f32 0.0, %v998
    %v1000 = vpop.f32.mrb[0].mxu0
    %v1001 = vpop.f32.mrb[0].mxu0
    %v1002 = vadd.f32 0.0, %v1001
    %v1003 = vpop.f32.mrb[0].mxu0
    %1004 = vmatprep.mubr.bf16.mxu0 0
    %1005 = vmatmul.mubr.bf16.gmra.mrb[0].mxu0 %v886
    %v1006 = vpop.f32.mrb[0].mxu0
    %v1007 = vadd.f32 0.0, %v1006
    %v1008 = vpop.f32.mrb[0].mxu0
    %v1009 = vpop.f32.mrb[0].mxu0
    %v1010 = vadd.f32 0.0, %v1009
    %v1011 = vpop.f32.mrb[0].mxu0
    %1012 = vmatprep.mubr.bf16.mxu0 0
    %1013 = vmatmul.mubr.bf16.gmra.mrb[0].mxu0 %v887
    %v1014 = vpop.f32.mrb[0].mxu0
    %v1015 = vadd.f32 0.0, %v1014
    %v1016 = vpop.f32.mrb[0].mxu0
    %v1017 = vpop.f32.mrb[0].mxu0
    %v1018 = vadd.f32 0.0, %v1017
    %v1019 = vpop.f32.mrb[0].mxu0
    %1020 = vmatprep.mubr.bf16.mxu0 0
    %1021 = vmatmul.mubr.bf16.gmra.mrb[0].mxu0 %v888
    %v1022 = vpop.f32.mrb[0].mxu0
    %v1023 = vadd.f32 0.0, %v1022
    %v1024 = vpop.f32.mrb[0].mxu0
    %v1025 = vpop.f32.mrb[0].mxu0
    %v1026 = vadd.f32 0.0, %v1025
    %v1027 = vpop.f32.mrb[0].mxu0
    %1028 = vmatprep.mubr.bf16.mxu0 0
    %1029 = vmatmul.mubr.bf16.gmra.mrb[0].mxu0 %v889
    %v1030 = vpop.f32.mrb[0].mxu0
    %v1031 = vadd.f32 0.0, %v1030
    %v1032 = vpop.f32.mrb[0].mxu0
    %v1033 = vpop.f32.mrb[0].mxu0
    %v1034 = vadd.f32 0.0, %v1033
    %v1035 = vpop.f32.mrb[0].mxu0
    %1036 = vmatprep.mubr.bf16.mxu0 0
    %1037 = vmatmul.mubr.bf16.gmra.mrb[0].mxu0 %v890
    %v1038 = vpop.f32.mrb[0].mxu0
    %v1039 = vadd.f32 0.0, %v1038
    %v1040 = vpop.f32.mrb[0].mxu0
    %v1041 = vpop.f32.mrb[0].mxu0
    %v1042 = vadd.f32 0.0, %v1041
    %v1043 = vpop.f32.mrb[0].mxu0
    %1044 = vmatprep.mubr.bf16.mxu0 0
    %1045 = vmatmul.mubr.bf16.gmra.mrb[0].mxu0 %v891
    %v1046 = vpop.f32.mrb[0].mxu0
    %v1047 = vadd.f32 0.0, %v1046
    %v1048 = vpop.f32.mrb[0].mxu0
    %v1049 = vpop.f32.mrb[0].mxu0
    %v1050 = vadd.f32 0.0, %v1049
    %v1051 = vpop.f32.mrb[0].mxu0
    %1052 = vdwg.mxu0
    %v1053 = vadd.f32 %v991, %v994
    %v1054 = vadd.f32 %v1053, %v999
    %v1055 = vadd.f32 %v1054, %v1002
    %v1056 = vadd.f32 %v1055, %v1007
    %v1057 = vadd.f32 %v1056, %v1010
    %v1058 = vadd.f32 %v1057, %v1015
    %v1059 = vadd.f32 %v1058, %v1018
    %v1060 = vadd.f32 %v1059, %v1023
    %v1061 = vadd.f32 %v1060, %v1026
    %v1062 = vadd.f32 %v1061, %v1031
    %v1063 = vadd.f32 %v1062, %v1034
    %v1064 = vadd.f32 %v1063, %v1039
    %v1065 = vadd.f32 %v1064, %v1042
    %v1066 = vadd.f32 %v1065, %v1047
    %v1067 = vadd.f32 %v1066, %v1050
    %v1068 = vrot.slane %v1067, 4
    %v1069 = vadd.f32 %v1067, %v1068
    %v1070 = vrot.slane %v1069, 2
    %v1071 = vadd.f32 %v1069, %v1070
    %v1072 = vrot.slane %v1071, 1
    %v1073 = vadd.f32 %v1071, %v1072
    %v1074 = vmul.f32 %v1073, %v287
    %v1075 = vsub.f32 %v991, %v1074
    %v1076 = vsub.f32 %v994, %v1074
    %v1077 = vsub.f32 %v999, %v1074
    %v1078 = vsub.f32 %v1002, %v1074
    %v1079 = vsub.f32 %v1007, %v1074
    %v1080 = vsub.f32 %v1010, %v1074
    %v1081 = vsub.f32 %v1015, %v1074
    %v1082 = vsub.f32 %v1018, %v1074
    %v1083 = vsub.f32 %v1023, %v1074
    %v1084 = vsub.f32 %v1026, %v1074
    %v1085 = vsub.f32 %v1031, %v1074
    %v1086 = vsub.f32 %v1034, %v1074
    %v1087 = vsub.f32 %v1039, %v1074
    %v1088 = vsub.f32 %v1042, %v1074
    %v1089 = vsub.f32 %v1047, %v1074
    %v1090 = vsub.f32 %v1050, %v1074
    %v1091 = vmul.f32 %v1075, %v1075
    %v1092 = vmul.f32 %v1076, %v1076
    %v1093 = vmul.f32 %v1077, %v1077
    %v1094 = vmul.f32 %v1078, %v1078
    %v1095 = vmul.f32 %v1079, %v1079
    %v1096 = vmul.f32 %v1080, %v1080
    %v1097 = vmul.f32 %v1081, %v1081
    %v1098 = vmul.f32 %v1082, %v1082
    %v1099 = vmul.f32 %v1083, %v1083
    %v1100 = vmul.f32 %v1084, %v1084
    %v1101 = vmul.f32 %v1085, %v1085
    %v1102 = vmul.f32 %v1086, %v1086
    %v1103 = vmul.f32 %v1087, %v1087
    %v1104 = vmul.f32 %v1088, %v1088
    %v1105 = vmul.f32 %v1089, %v1089
    %v1106 = vmul.f32 %v1090, %v1090
    %v1107 = vadd.f32 %v1091, %v1092
    %v1108 = vadd.f32 %v1107, %v1093
    %v1109 = vadd.f32 %v1108, %v1094
    %v1110 = vadd.f32 %v1109, %v1095
    %v1111 = vadd.f32 %v1110, %v1096
    %v1112 = vadd.f32 %v1111, %v1097
    %v1113 = vadd.f32 %v1112, %v1098
    %v1114 = vadd.f32 %v1113, %v1099
    %v1115 = vadd.f32 %v1114, %v1100
    %v1116 = vadd.f32 %v1115, %v1101
    %v1117 = vadd.f32 %v1116, %v1102
    %v1118 = vadd.f32 %v1117, %v1103
    %v1119 = vadd.f32 %v1118, %v1104
    %v1120 = vadd.f32 %v1119, %v1105
    %v1121 = vadd.f32 %v1120, %v1106
    %v1122 = vrot.slane %v1121, 4
    %v1123 = vadd.f32 %v1121, %v1122
    %v1124 = vrot.slane %v1123, 2
    %v1125 = vadd.f32 %v1123, %v1124
    %v1126 = vrot.slane %v1125, 1
    %v1127 = vadd.f32 %v1125, %v1126
    %v1128 = vmul.f32 %v1127, %v287
    %v1129 = vld [vmem:[%s2 + $0x5] sm:$0x1]
    %v1130 = vadd.f32 %v1128, 1e-05
    %v1131 = vrsqrt.pop %v1130
    %v1132 = vmul.f32 %v1129, %v1131
    %v1133 = vlaneseq
    %v1134 = vshrl.u32 %v1133, 7
    %v1135 = vsub.s32 0, %v1134
    %v1136 = vrot.slane %v1132, %v1135
    %v1137 = vmul.f32 %v1075, %v1136
    %v1138 = vmul.f32 %v1076, %v1136
    %v1139 = vmul.f32 %v1077, %v1136
    %v1140 = vmul.f32 %v1078, %v1136
    %v1141 = vmul.f32 %v1079, %v1136
    %v1142 = vmul.f32 %v1080, %v1136
    %v1143 = vmul.f32 %v1081, %v1136
    %v1144 = vmul.f32 %v1082, %v1136
    %v1145 = vmul.f32 %v1083, %v1136
    %v1146 = vmul.f32 %v1084, %v1136
    %v1147 = vmul.f32 %v1085, %v1136
    %v1148 = vmul.f32 %v1086, %v1136
    %v1149 = vmul.f32 %v1087, %v1136
    %v1150 = vmul.f32 %v1088, %v1136
    %v1151 = vmul.f32 %v1089, %v1136
    %v1152 = vmul.f32 %v1090, %v1136
    %v1153 = vld [vmem:[%s2 + $0x6] sm:$0x1]
    %v1154 = vlaneseq
    %v1155 = vshrl.u32 %v1154, 7
    %v1156 = vsub.s32 0, %v1155
    %v1157 = vrot.slane %v1153, %v1156
    %v1158 = vadd.f32 %v1137, %v1157
    %v1159 = vadd.f32 %v1138, %v1157
    %v1160 = vadd.f32 %v1139, %v1157
    %v1161 = vadd.f32 %v1140, %v1157
    %v1162 = vadd.f32 %v1141, %v1157
    %v1163 = vadd.f32 %v1142, %v1157
    %v1164 = vadd.f32 %v1143, %v1157
    %v1165 = vadd.f32 %v1144, %v1157
    %v1166 = vadd.f32 %v1145, %v1157
    %v1167 = vadd.f32 %v1146, %v1157
    %v1168 = vadd.f32 %v1147, %v1157
    %v1169 = vadd.f32 %v1148, %v1157
    %v1170 = vadd.f32 %v1149, %v1157
    %v1171 = vadd.f32 %v1150, %v1157
    %v1172 = vadd.f32 %v1151, %v1157
    %v1173 = vadd.f32 %v1152, %v1157
    %v1174 = vmax.f32 %v1158, 0.0
    %v1175 = vmax.f32 %v1159, 0.0
    %v1176 = vmax.f32 %v1160, 0.0
    %v1177 = vmax.f32 %v1161, 0.0
    %v1178 = vmax.f32 %v1162, 0.0
    %v1179 = vmax.f32 %v1163, 0.0
    %v1180 = vmax.f32 %v1164, 0.0
    %v1181 = vmax.f32 %v1165, 0.0
    %v1182 = vmax.f32 %v1166, 0.0
    %v1183 = vmax.f32 %v1167, 0.0
    %v1184 = vmax.f32 %v1168, 0.0
    %v1185 = vmax.f32 %v1169, 0.0
    %v1186 = vmax.f32 %v1170, 0.0
    %v1187 = vmax.f32 %v1171, 0.0
    %v1188 = vmax.f32 %v1172, 0.0
    %v1189 = vmax.f32 %v1173, 0.0
    %v1190 = vpack.c.bf16 %v1175, %v1174
    %v1191 = vpack.c.bf16 %v1177, %v1176
    %v1192 = vpack.c.bf16 %v1179, %v1178
    %v1193 = vpack.c.bf16 %v1181, %v1180
    %v1194 = vpack.c.bf16 %v1183, %v1182
    %v1195 = vpack.c.bf16 %v1185, %v1184
    %v1196 = vpack.c.bf16 %v1187, %v1186
    %v1197 = vpack.c.bf16 %v1189, %v1188
    %v1198 = vld [vmem:[#allocation3 + $0x100] sm:$0xf]
    %v1199 = vld [vmem:[#allocation3 + $0x104] sm:$0xf]
    %v1200 = vld [vmem:[#allocation3 + $0x108] sm:$0xf]
    %v1201 = vld [vmem:[#allocation3 + $0x10c] sm:$0xf]
    %v1202 = vld [vmem:[#allocation3 + $0x110] sm:$0xf]
    %v1203 = vld [vmem:[#allocation3 + $0x114] sm:$0xf]
    %v1204 = vld [vmem:[#allocation3 + $0x118] sm:$0xf]
    %v1205 = vld [vmem:[#allocation3 + $0x11c] sm:$0xf]
    %v1206 = vld [vmem:[#allocation3 + $0x120] sm:$0xf]
    %v1207 = vld [vmem:[#allocation3 + $0x124] sm:$0xf]
    %v1208 = vld [vmem:[#allocation3 + $0x128] sm:$0xf]
    %v1209 = vld [vmem:[#allocation3 + $0x12c] sm:$0xf]
    %v1210 = vld [vmem:[#allocation3 + $0x130] sm:$0xf]
    %v1211 = vld [vmem:[#allocation3 + $0x134] sm:$0xf]
    %v1212 = vld [vmem:[#allocation3 + $0x138] sm:$0xf]
    %v1213 = vld [vmem:[#allocation3 + $0x13c] sm:$0xf]
    %v1230 = vunpack.c.l.b16 %v1198
    %v1231 = vunpack.c.l.b16 %v1199
    %v1232 = vunpack.c.l.b16 %v1200
    %v1233 = vunpack.c.l.b16 %v1201
    %v1234 = vunpack.c.l.b16 %v1202
    %v1235 = vunpack.c.l.b16 %v1203
    %v1236 = vunpack.c.l.b16 %v1204
    %v1237 = vunpack.c.l.b16 %v1205
    %v1238 = vunpack.c.l.b16 %v1206
    %v1239 = vunpack.c.l.b16 %v1207
    %v1240 = vunpack.c.l.b16 %v1208
    %v1241 = vunpack.c.l.b16 %v1209
    %v1242 = vunpack.c.l.b16 %v1210
    %v1243 = vunpack.c.l.b16 %v1211
    %v1244 = vunpack.c.l.b16 %v1212
    %v1245 = vunpack.c.l.b16 %v1213
    %v1246 = vpack.c.b16 %v1231, %v1230
    %v1247 = vpack.c.b16 %v1233, %v1232
    %v1248 = vpack.c.b16 %v1235, %v1234
    %v1249 = vpack.c.b16 %v1237, %v1236
    %v1250 = vpack.c.b16 %v1239, %v1238
    %v1251 = vpack.c.b16 %v1241, %v1240
    %v1252 = vpack.c.b16 %v1243, %v1242
    %v1253 = vpack.c.b16 %v1245, %v1244
    %1262 = vmatprep.subr.bf16.mxu0 0
    %1263 = vmatpush1.bf16.msra.mxu0 %v1246
    %1264 = vmatprep.subr.bf16.mxu0 0
    %1265 = vmatpush1.bf16.msra.mxu0 %v1247
    %1266 = vmatprep.subr.bf16.mxu0 0
    %1267 = vmatpush1.bf16.msra.mxu0 %v1248
    %1268 = vmatprep.subr.bf16.mxu0 0
    %1269 = vmatpush1.bf16.msra.mxu0 %v1249
    %1270 = vmatprep.subr.bf16.mxu0 0
    %1271 = vmatpush1.bf16.msra.mxu0 %v1250
    %1272 = vmatprep.subr.bf16.mxu0 0
    %1273 = vmatpush1.bf16.msra.mxu0 %v1251
    %1274 = vmatprep.subr.bf16.mxu0 0
    %1275 = vmatpush1.bf16.msra.mxu0 %v1252
    %1276 = vmatprep.subr.bf16.mxu0 0
    %1277 = vmatpush1.bf16.msra.mxu0 %v1253
    %1278 = vmatprep.subr.bf16.mxu0 0
    %1279 = vmatpush1.bf16.msra.mxu0 0
    %1280 = vmatprep.subr.bf16.mxu0 0
    %1281 = vmatpush1.bf16.msra.mxu0 0
    %1282 = vmatprep.subr.bf16.mxu0 0
    %1283 = vmatpush1.bf16.msra.mxu0 0
    %1284 = vmatprep.subr.bf16.mxu0 0
    %1285 = vmatpush1.bf16.msra.mxu0 0
    %1286 = vmatprep.subr.bf16.mxu0 0
    %1287 = vmatpush1.bf16.msra.mxu0 0
    %1288 = vmatprep.subr.bf16.mxu0 0
    %1289 = vmatpush1.bf16.msra.mxu0 0
    %1290 = vmatprep.subr.bf16.mxu0 0
    %1291 = vmatpush1.bf16.msra.mxu0 0
    %1292 = vmatprep.subr.bf16.mxu0 0
    %1293 = vmatpush1.bf16.msra.mxu0 0
    %1294 = vmatprep.mubr.bf16.mxu0 0
    %1295 = vmatmul.mubr.bf16.gmra.mrb[0].mxu0 %v1190
    %v1296 = vpop.f32.mrb[0].mxu0
    %v1297 = vadd.f32 0.0, %v1296
    %v1298 = vpop.f32.mrb[0].mxu0
    %v1299 = vpop.f32.mrb[0].mxu0
    %v1300 = vadd.f32 0.0, %v1299
    %v1301 = vpop.f32.mrb[0].mxu0
    %1302 = vmatprep.mubr.bf16.mxu0 0
    %1303 = vmatmul.mubr.bf16.gmra.mrb[0].mxu0 %v1191
    %v1304 = vpop.f32.mrb[0].mxu0
    %v1305 = vadd.f32 0.0, %v1304
    %v1306 = vpop.f32.mrb[0].mxu0
    %v1307 = vpop.f32.mrb[0].mxu0
    %v1308 = vadd.f32 0.0, %v1307
    %v1309 = vpop.f32.mrb[0].mxu0
    %1310 = vmatprep.mubr.bf16.mxu0 0
    %1311 = vmatmul.mubr.bf16.gmra.mrb[0].mxu0 %v1192
    %v1312 = vpop.f32.mrb[0].mxu0
    %v1313 = vadd.f32 0.0, %v1312
    %v1314 = vpop.f32.mrb[0].mxu0
    %v1315 = vpop.f32.mrb[0].mxu0
    %v1316 = vadd.f32 0.0, %v1315
    %v1317 = vpop.f32.mrb[0].mxu0
    %1318 = vmatprep.mubr.bf16.mxu0 0
    %1319 = vmatmul.mubr.bf16.gmra.mrb[0].mxu0 %v1193
    %v1320 = vpop.f32.mrb[0].mxu0
    %v1321 = vadd.f32 0.0, %v1320
    %v1322 = vpop.f32.mrb[0].mxu0
    %v1323 = vpop.f32.mrb[0].mxu0
    %v1324 = vadd.f32 0.0, %v1323
    %v1325 = vpop.f32.mrb[0].mxu0
    %1326 = vmatprep.mubr.bf16.mxu0 0
    %1327 = vmatmul.mubr.bf16.gmra.mrb[0].mxu0 %v1194
    %v1328 = vpop.f32.mrb[0].mxu0
    %v1329 = vadd.f32 0.0, %v1328
    %v1330 = vpop.f32.mrb[0].mxu0
    %v1331 = vpop.f32.mrb[0].mxu0
    %v1332 = vadd.f32 0.0, %v1331
    %v1333 = vpop.f32.mrb[0].mxu0
    %1334 = vmatprep.mubr.bf16.mxu0 0
    %1335 = vmatmul.mubr.bf16.gmra.mrb[0].mxu0 %v1195
    %v1336 = vpop.f32.mrb[0].mxu0
    %v1337 = vadd.f32 0.0, %v1336
    %v1338 = vpop.f32.mrb[0].mxu0
    %v1339 = vpop.f32.mrb[0].mxu0
    %v1340 = vadd.f32 0.0, %v1339
    %v1341 = vpop.f32.mrb[0].mxu0
    %1342 = vmatprep.mubr.bf16.mxu0 0
    %1343 = vmatmul.mubr.bf16.gmra.mrb[0].mxu0 %v1196
    %v1344 = vpop.f32.mrb[0].mxu0
    %v1345 = vadd.f32 0.0, %v1344
    %v1346 = vpop.f32.mrb[0].mxu0
    %v1347 = vpop.f32.mrb[0].mxu0
    %v1348 = vadd.f32 0.0, %v1347
    %v1349 = vpop.f32.mrb[0].mxu0
    %1350 = vmatprep.mubr.bf16.mxu0 0
    %1351 = vmatmul.mubr.bf16.gmra.mrb[0].mxu0 %v1197
    %v1352 = vpop.f32.mrb[0].mxu0
    %v1353 = vadd.f32 0.0, %v1352
    %v1354 = vpop.f32.mrb[0].mxu0
    %v1355 = vpop.f32.mrb[0].mxu0
    %v1356 = vadd.f32 0.0, %v1355
    %v1357 = vpop.f32.mrb[0].mxu0
    %1358 = vdwg.mxu0
    %v1359 = vadd.f32 %v1297, %v1300
    %v1360 = vadd.f32 %v1359, %v1305
    %v1361 = vadd.f32 %v1360, %v1308
    %v1362 = vadd.f32 %v1361, %v1313
    %v1363 = vadd.f32 %v1362, %v1316
    %v1364 = vadd.f32 %v1363, %v1321
    %v1365 = vadd.f32 %v1364, %v1324
    %v1366 = vadd.f32 %v1365, %v1329
    %v1367 = vadd.f32 %v1366, %v1332
    %v1368 = vadd.f32 %v1367, %v1337
    %v1369 = vadd.f32 %v1368, %v1340
    %v1370 = vadd.f32 %v1369, %v1345
    %v1371 = vadd.f32 %v1370, %v1348
    %v1372 = vadd.f32 %v1371, %v1353
    %v1373 = vadd.f32 %v1372, %v1356
    %v1374 = vrot.slane %v1373, 4
    %v1375 = vadd.f32 %v1373, %v1374
    %v1376 = vrot.slane %v1375, 2
    %v1377 = vadd.f32 %v1375, %v1376
    %v1378 = vrot.slane %v1377, 1
    %v1379 = vadd.f32 %v1377, %v1378
    %v1380 = vmul.f32 %v1379, %v287
    %v1381 = vsub.f32 %v1297, %v1380
    %v1382 = vsub.f32 %v1300, %v1380
    %v1383 = vsub.f32 %v1305, %v1380
    %v1384 = vsub.f32 %v1308, %v1380
    %v1385 = vsub.f32 %v1313, %v1380
    %v1386 = vsub.f32 %v1316, %v1380
    %v1387 = vsub.f32 %v1321, %v1380
    %v1388 = vsub.f32 %v1324, %v1380
    %v1389 = vsub.f32 %v1329, %v1380
    %v1390 = vsub.f32 %v1332, %v1380
    %v1391 = vsub.f32 %v1337, %v1380
    %v1392 = vsub.f32 %v1340, %v1380
    %v1393 = vsub.f32 %v1345, %v1380
    %v1394 = vsub.f32 %v1348, %v1380
    %v1395 = vsub.f32 %v1353, %v1380
    %v1396 = vsub.f32 %v1356, %v1380
    %v1397 = vmul.f32 %v1381, %v1381
    %v1398 = vmul.f32 %v1382, %v1382
    %v1399 = vmul.f32 %v1383, %v1383
    %v1400 = vmul.f32 %v1384, %v1384
    %v1401 = vmul.f32 %v1385, %v1385
    %v1402 = vmul.f32 %v1386, %v1386
    %v1403 = vmul.f32 %v1387, %v1387
    %v1404 = vmul.f32 %v1388, %v1388
    %v1405 = vmul.f32 %v1389, %v1389
    %v1406 = vmul.f32 %v1390, %v1390
    %v1407 = vmul.f32 %v1391, %v1391
    %v1408 = vmul.f32 %v1392, %v1392
    %v1409 = vmul.f32 %v1393, %v1393
    %v1410 = vmul.f32 %v1394, %v1394
    %v1411 = vmul.f32 %v1395, %v1395
    %v1412 = vmul.f32 %v1396, %v1396
    %v1413 = vadd.f32 %v1397, %v1398
    %v1414 = vadd.f32 %v1413, %v1399
    %v1415 = vadd.f32 %v1414, %v1400
    %v1416 = vadd.f32 %v1415, %v1401
    %v1417 = vadd.f32 %v1416, %v1402
    %v1418 = vadd.f32 %v1417, %v1403
    %v1419 = vadd.f32 %v1418, %v1404
    %v1420 = vadd.f32 %v1419, %v1405
    %v1421 = vadd.f32 %v1420, %v1406
    %v1422 = vadd.f32 %v1421, %v1407
    %v1423 = vadd.f32 %v1422, %v1408
    %v1424 = vadd.f32 %v1423, %v1409
    %v1425 = vadd.f32 %v1424, %v1410
    %v1426 = vadd.f32 %v1425, %v1411
    %v1427 = vadd.f32 %v1426, %v1412
    %v1428 = vrot.slane %v1427, 4
    %v1429 = vadd.f32 %v1427, %v1428
    %v1430 = vrot.slane %v1429, 2
    %v1431 = vadd.f32 %v1429, %v1430
    %v1432 = vrot.slane %v1431, 1
    %v1433 = vadd.f32 %v1431, %v1432
    %v1434 = vmul.f32 %v1433, %v287
    %v1435 = vld [vmem:[%s2 + $0x7] sm:$0x1]
    %v1436 = vadd.f32 %v1434, 1e-05
    %v1437 = vrsqrt.pop %v1436
    %v1438 = vmul.f32 %v1435, %v1437
    %v1439 = vlaneseq
    %v1440 = vshrl.u32 %v1439, 7
    %v1441 = vsub.s32 0, %v1440
    %v1442 = vrot.slane %v1438, %v1441
    %v1443 = vmul.f32 %v1381, %v1442
    %v1444 = vmul.f32 %v1382, %v1442
    %v1445 = vmul.f32 %v1383, %v1442
    %v1446 = vmul.f32 %v1384, %v1442
    %v1447 = vmul.f32 %v1385, %v1442
    %v1448 = vmul.f32 %v1386, %v1442
    %v1449 = vmul.f32 %v1387, %v1442
    %v1450 = vmul.f32 %v1388, %v1442
    %v1451 = vmul.f32 %v1389, %v1442
    %v1452 = vmul.f32 %v1390, %v1442
    %v1453 = vmul.f32 %v1391, %v1442
    %v1454 = vmul.f32 %v1392, %v1442
    %v1455 = vmul.f32 %v1393, %v1442
    %v1456 = vmul.f32 %v1394, %v1442
    %v1457 = vmul.f32 %v1395, %v1442
    %v1458 = vmul.f32 %v1396, %v1442
    %v1459 = vld [vmem:[%s2 + $0x8] sm:$0x1]
    %v1460 = vlaneseq
    %v1461 = vshrl.u32 %v1460, 7
    %v1462 = vsub.s32 0, %v1461
    %v1463 = vrot.slane %v1459, %v1462
    %v1464 = vadd.f32 %v1443, %v1463
    %v1465 = vadd.f32 %v1444, %v1463
    %v1466 = vadd.f32 %v1445, %v1463
    %v1467 = vadd.f32 %v1446, %v1463
    %v1468 = vadd.f32 %v1447, %v1463
    %v1469 = vadd.f32 %v1448, %v1463
    %v1470 = vadd.f32 %v1449, %v1463
    %v1471 = vadd.f32 %v1450, %v1463
    %v1472 = vadd.f32 %v1451, %v1463
    %v1473 = vadd.f32 %v1452, %v1463
    %v1474 = vadd.f32 %v1453, %v1463
    %v1475 = vadd.f32 %v1454, %v1463
    %v1476 = vadd.f32 %v1455, %v1463
    %v1477 = vadd.f32 %v1456, %v1463
    %v1478 = vadd.f32 %v1457, %v1463
    %v1479 = vadd.f32 %v1458, %v1463
    %v1480 = vmax.f32 %v1464, 0.0
    %v1481 = vmax.f32 %v1465, 0.0
    %v1482 = vmax.f32 %v1466, 0.0
    %v1483 = vmax.f32 %v1467, 0.0
    %v1484 = vmax.f32 %v1468, 0.0
    %v1485 = vmax.f32 %v1469, 0.0
    %v1486 = vmax.f32 %v1470, 0.0
    %v1487 = vmax.f32 %v1471, 0.0
    %v1488 = vmax.f32 %v1472, 0.0
    %v1489 = vmax.f32 %v1473, 0.0
    %v1490 = vmax.f32 %v1474, 0.0
    %v1491 = vmax.f32 %v1475, 0.0
    %v1492 = vmax.f32 %v1476, 0.0
    %v1493 = vmax.f32 %v1477, 0.0
    %v1494 = vmax.f32 %v1478, 0.0
    %v1495 = vmax.f32 %v1479, 0.0
    %v1496 = vpack.c.bf16 %v1481, %v1480
    %v1497 = vpack.c.bf16 %v1483, %v1482
    %v1498 = vpack.c.bf16 %v1485, %v1484
    %v1499 = vpack.c.bf16 %v1487, %v1486
    %v1500 = vpack.c.bf16 %v1489, %v1488
    %v1501 = vpack.c.bf16 %v1491, %v1490
    %v1502 = vpack.c.bf16 %v1493, %v1492
    %v1503 = vpack.c.bf16 %v1495, %v1494
    %v1504 = vld [vmem:[#allocation3 + $0x140] sm:$0xf]
    %v1505 = vld [vmem:[#allocation3 + $0x144] sm:$0xf]
    %v1506 = vld [vmem:[#allocation3 + $0x148] sm:$0xf]
    %v1507 = vld [vmem:[#allocation3 + $0x14c] sm:$0xf]
    %v1508 = vld [vmem:[#allocation3 + $0x150] sm:$0xf]
    %v1509 = vld [vmem:[#allocation3 + $0x154] sm:$0xf]
    %v1510 = vld [vmem:[#allocation3 + $0x158] sm:$0xf]
    %v1511 = vld [vmem:[#allocation3 + $0x15c] sm:$0xf]
    %v1512 = vld [vmem:[#allocation3 + $0x160] sm:$0xf]
    %v1513 = vld [vmem:[#allocation3 + $0x164] sm:$0xf]
    %v1514 = vld [vmem:[#allocation3 + $0x168] sm:$0xf]
    %v1515 = vld [vmem:[#allocation3 + $0x16c] sm:$0xf]
    %v1516 = vld [vmem:[#allocation3 + $0x170] sm:$0xf]
    %v1517 = vld [vmem:[#allocation3 + $0x174] sm:$0xf]
    %v1518 = vld [vmem:[#allocation3 + $0x178] sm:$0xf]
    %v1519 = vld [vmem:[#allocation3 + $0x17c] sm:$0xf]
    %v1520 = vld [vmem:[%s2 + $0x9] sm:$0x1]
    %v1521 = vlaneseq
    %v1522 = vshrl.u32 %v1521, 7
    %v1523 = vsub.s32 0, %v1522
    %v1524 = vrot.slane %v1520, %v1523
    %v1541 = vunpack.c.l.b16 %v1504
    %v1542 = vunpack.c.l.b16 %v1505
    %v1543 = vunpack.c.l.b16 %v1506
    %v1544 = vunpack.c.l.b16 %v1507
    %v1545 = vunpack.c.l.b16 %v1508
    %v1546 = vunpack.c.l.b16 %v1509
    %v1547 = vunpack.c.l.b16 %v1510
    %v1548 = vunpack.c.l.b16 %v1511
    %v1549 = vunpack.c.l.b16 %v1512
    %v1550 = vunpack.c.l.b16 %v1513
    %v1551 = vunpack.c.l.b16 %v1514
    %v1552 = vunpack.c.l.b16 %v1515
    %v1553 = vunpack.c.l.b16 %v1516
    %v1554 = vunpack.c.l.b16 %v1517
    %v1555 = vunpack.c.l.b16 %v1518
    %v1556 = vunpack.c.l.b16 %v1519
    %v1557 = vpack.c.b16 %v1542, %v1541
    %v1558 = vpack.c.b16 %v1544, %v1543
    %v1559 = vpack.c.b16 %v1546, %v1545
    %v1560 = vpack.c.b16 %v1548, %v1547
    %v1561 = vpack.c.b16 %v1550, %v1549
    %v1562 = vpack.c.b16 %v1552, %v1551
    %v1563 = vpack.c.b16 %v1554, %v1553
    %v1564 = vpack.c.b16 %v1556, %v1555
    %1573 = vmatprep.subr.bf16.mxu0 0
    %1574 = vmatpush1.bf16.msra.mxu0 %v1557
    %1575 = vmatprep.subr.bf16.mxu0 0
    %1576 = vmatpush1.bf16.msra.mxu0 %v1558
    %1577 = vmatprep.subr.bf16.mxu0 0
    %1578 = vmatpush1.bf16.msra.mxu0 %v1559
    %1579 = vmatprep.subr.bf16.mxu0 0
    %1580 = vmatpush1.bf16.msra.mxu0 %v1560
    %1581 = vmatprep.subr.bf16.mxu0 0
    %1582 = vmatpush1.bf16.msra.mxu0 %v1561
    %1583 = vmatprep.subr.bf16.mxu0 0
    %1584 = vmatpush1.bf16.msra.mxu0 %v1562
    %1585 = vmatprep.subr.bf16.mxu0 0
    %1586 = vmatpush1.bf16.msra.mxu0 %v1563
    %1587 = vmatprep.subr.bf16.mxu0 0
    %1588 = vmatpush1.bf16.msra.mxu0 %v1564
    %1589 = vmatprep.subr.bf16.mxu0 0
    %1590 = vmatpush1.bf16.msra.mxu0 0
    %1591 = vmatprep.subr.bf16.mxu0 0
    %1592 = vmatpush1.bf16.msra.mxu0 0
    %1593 = vmatprep.subr.bf16.mxu0 0
    %1594 = vmatpush1.bf16.msra.mxu0 0
    %1595 = vmatprep.subr.bf16.mxu0 0
    %1596 = vmatpush1.bf16.msra.mxu0 0
    %1597 = vmatprep.subr.bf16.mxu0 0
    %1598 = vmatpush1.bf16.msra.mxu0 0
    %1599 = vmatprep.subr.bf16.mxu0 0
    %1600 = vmatpush1.bf16.msra.mxu0 0
    %1601 = vmatprep.subr.bf16.mxu0 0
    %1602 = vmatpush1.bf16.msra.mxu0 0
    %1603 = vmatprep.subr.bf16.mxu0 0
    %1604 = vmatpush1.bf16.msra.mxu0 0
    %1605 = vmatprep.mubr.bf16.mxu0 0
    %1606 = vmatmul.mubr.bf16.gmra.mrb[0].mxu0 %v1496
    %v1607 = vpop.f32.mrb[0].mxu0
    %v1608 = vadd.f32 %v1524, %v1607
    %v1609 = vpop.f32.mrb[0].mxu0
    %v1610 = vpop.f32.mrb[0].mxu0
    %v1611 = vadd.f32 %v1524, %v1610
    %v1612 = vpop.f32.mrb[0].mxu0
    %1613 = vmatprep.mubr.bf16.mxu0 0
    %1614 = vmatmul.mubr.bf16.gmra.mrb[0].mxu0 %v1497
    %v1615 = vpop.f32.mrb[0].mxu0
    %v1616 = vadd.f32 %v1524, %v1615
    %v1617 = vpop.f32.mrb[0].mxu0
    %v1618 = vpop.f32.mrb[0].mxu0
    %v1619 = vadd.f32 %v1524, %v1618
    %v1620 = vpop.f32.mrb[0].mxu0
    %1621 = vmatprep.mubr.bf16.mxu0 0
    %1622 = vmatmul.mubr.bf16.gmra.mrb[0].mxu0 %v1498
    %v1623 = vpop.f32.mrb[0].mxu0
    %v1624 = vadd.f32 %v1524, %v1623
    %v1625 = vpop.f32.mrb[0].mxu0
    %v1626 = vpop.f32.mrb[0].mxu0
    %v1627 = vadd.f32 %v1524, %v1626
    %v1628 = vpop.f32.mrb[0].mxu0
    %1629 = vmatprep.mubr.bf16.mxu0 0
    %1630 = vmatmul.mubr.bf16.gmra.mrb[0].mxu0 %v1499
    %v1631 = vpop.f32.mrb[0].mxu0
    %v1632 = vadd.f32 %v1524, %v1631
    %v1633 = vpop.f32.mrb[0].mxu0
    %v1634 = vpop.f32.mrb[0].mxu0
    %v1635 = vadd.f32 %v1524, %v1634
    %v1636 = vpop.f32.mrb[0].mxu0
    %1637 = vmatprep.mubr.bf16.mxu0 0
    %1638 = vmatmul.mubr.bf16.gmra.mrb[0].mxu0 %v1500
    %v1639 = vpop.f32.mrb[0].mxu0
    %v1640 = vadd.f32 %v1524, %v1639
    %v1641 = vpop.f32.mrb[0].mxu0
    %v1642 = vpop.f32.mrb[0].mxu0
    %v1643 = vadd.f32 %v1524, %v1642
    %v1644 = vpop.f32.mrb[0].mxu0
    %1645 = vmatprep.mubr.bf16.mxu0 0
    %1646 = vmatmul.mubr.bf16.gmra.mrb[0].mxu0 %v1501
    %v1647 = vpop.f32.mrb[0].mxu0
    %v1648 = vadd.f32 %v1524, %v1647
    %v1649 = vpop.f32.mrb[0].mxu0
    %v1650 = vpop.f32.mrb[0].mxu0
    %v1651 = vadd.f32 %v1524, %v1650
    %v1652 = vpop.f32.mrb[0].mxu0
    %1653 = vmatprep.mubr.bf16.mxu0 0
    %1654 = vmatmul.mubr.bf16.gmra.mrb[0].mxu0 %v1502
    %v1655 = vpop.f32.mrb[0].mxu0
    %v1656 = vadd.f32 %v1524, %v1655
    %v1657 = vpop.f32.mrb[0].mxu0
    %v1658 = vpop.f32.mrb[0].mxu0
    %v1659 = vadd.f32 %v1524, %v1658
    %v1660 = vpop.f32.mrb[0].mxu0
    %1661 = vmatprep.mubr.bf16.mxu0 0
    %1662 = vmatmul.mubr.bf16.gmra.mrb[0].mxu0 %v1503
    %v1663 = vpop.f32.mrb[0].mxu0
    %v1664 = vadd.f32 %v1524, %v1663
    %v1665 = vpop.f32.mrb[0].mxu0
    %v1666 = vpop.f32.mrb[0].mxu0
    %v1667 = vadd.f32 %v1524, %v1666
    %v1668 = vpop.f32.mrb[0].mxu0
    %1669 = vdwg.mxu0
    %1670 = vst [vmem:[%s3] sm:$0xff] %v1608
    %1671 = vst [vmem:[%s3 + $0x10] sm:$0xff] %v1611
    %1672 = vst [vmem:[%s3 + $0x20] sm:$0xff] %v1616
    %1673 = vst [vmem:[%s3 + $0x30] sm:$0xff] %v1619
    %1674 = vst [vmem:[%s3 + $0x40] sm:$0xff] %v1624
    %1675 = vst [vmem:[%s3 + $0x50] sm:$0xff] %v1627
    %1676 = vst [vmem:[%s3 + $0x60] sm:$0xff] %v1632
    %1677 = vst [vmem:[%s3 + $0x70] sm:$0xff] %v1635
    %1678 = vst [vmem:[%s3 + $0x80] sm:$0xff] %v1640
    %1679 = vst [vmem:[%s3 + $0x90] sm:$0xff] %v1643
    %1680 = vst [vmem:[%s3 + $0xa0] sm:$0xff] %v1648
    %1681 = vst [vmem:[%s3 + $0xb0] sm:$0xff] %v1651
    %1682 = vst [vmem:[%s3 + $0xc0] sm:$0xff] %v1656
    %1683 = vst [vmem:[%s3 + $0xd0] sm:$0xff] %v1659
    %1684 = vst [vmem:[%s3 + $0xe0] sm:$0xff] %v1664
    %1685 = vst [vmem:[%s3 + $0xf0] sm:$0xff] %v1667
    %1686 = vst [vmem:[%s3 + $0x8] sm:$0xff] %v822
    %1687 = vst [vmem:[%s3 + $0x18] sm:$0xff] %v825
    %1688 = vst [vmem:[%s3 + $0x28] sm:$0xff] %v830
    %1689 = vst [vmem:[%s3 + $0x38] sm:$0xff] %v833
    %1690 = vst [vmem:[%s3 + $0x48] sm:$0xff] %v838
    %1691 = vst [vmem:[%s3 + $0x58] sm:$0xff] %v841
    %1692 = vst [vmem:[%s3 + $0x68] sm:$0xff] %v846
    %1693 = vst [vmem:[%s3 + $0x78] sm:$0xff] %v849
    %1694 = vst [vmem:[%s3 + $0x88] sm:$0xff] %v854
    %1695 = vst [vmem:[%s3 + $0x98] sm:$0xff] %v857
    %1696 = vst [vmem:[%s3 + $0xa8] sm:$0xff] %v862
    %1697 = vst [vmem:[%s3 + $0xb8] sm:$0xff] %v865
    %1698 = vst [vmem:[%s3 + $0xc8] sm:$0xff] %v870
    %1699 = vst [vmem:[%s3 + $0xd8] sm:$0xff] %v873
    %1700 = vst [vmem:[%s3 + $0xe8] sm:$0xff] %v878
    %1701 = vst [vmem:[%s3 + $0xf8] sm:$0xff] %v881
    %v1702 = vsub.f32 %v81, %v1608
    %v1703 = vsub.f32 %v82, %v1611
    %v1704 = vsub.f32 %v83, %v1616
    %v1705 = vsub.f32 %v84, %v1619
    %v1706 = vsub.f32 %v85, %v1624
    %v1707 = vsub.f32 %v86, %v1627
    %v1708 = vsub.f32 %v87, %v1632
    %v1709 = vsub.f32 %v88, %v1635
    %v1710 = vsub.f32 %v89, %v1640
    %v1711 = vsub.f32 %v90, %v1643
    %v1712 = vsub.f32 %v91, %v1648
    %v1713 = vsub.f32 %v92, %v1651
    %v1714 = vsub.f32 %v93, %v1656
    %v1715 = vsub.f32 %v94, %v1659
    %v1716 = vsub.f32 %v95, %v1664
    %v1717 = vsub.f32 %v96, %v1667
    %v1718 = vmul.f32 %v1702, %v1702
    %v1719 = vmul.f32 %v1703, %v1703
    %v1720 = vmul.f32 %v1704, %v1704
    %v1721 = vmul.f32 %v1705, %v1705
    %v1722 = vmul.f32 %v1706, %v1706
    %v1723 = vmul.f32 %v1707, %v1707
    %v1724 = vmul.f32 %v1708, %v1708
    %v1725 = vmul.f32 %v1709, %v1709
    %v1726 = vmul.f32 %v1710, %v1710
    %v1727 = vmul.f32 %v1711, %v1711
    %v1728 = vmul.f32 %v1712, %v1712
    %v1729 = vmul.f32 %v1713, %v1713
    %v1730 = vmul.f32 %v1714, %v1714
    %v1731 = vmul.f32 %v1715, %v1715
    %v1732 = vmul.f32 %v1716, %v1716
    %v1733 = vmul.f32 %v1717, %v1717
    %v1734 = vadd.f32 %v1718, %v1719
    %v1735 = vadd.f32 %v1734, %v1720
    %v1736 = vadd.f32 %v1735, %v1721
    %v1737 = vadd.f32 %v1736, %v1722
    %v1738 = vadd.f32 %v1737, %v1723
    %v1739 = vadd.f32 %v1738, %v1724
    %v1740 = vadd.f32 %v1739, %v1725
    %v1741 = vadd.f32 %v1740, %v1726
    %v1742 = vadd.f32 %v1741, %v1727
    %v1743 = vadd.f32 %v1742, %v1728
    %v1744 = vadd.f32 %v1743, %v1729
    %v1745 = vadd.f32 %v1744, %v1730
    %v1746 = vadd.f32 %v1745, %v1731
    %v1747 = vadd.f32 %v1746, %v1732
    %v1748 = vadd.f32 %v1747, %v1733
    %v1749 = vrot.slane %v1748, 4
    %v1750 = vadd.f32 %v1748, %v1749
    %v1751 = vrot.slane %v1750, 2
    %v1752 = vadd.f32 %v1750, %v1751
    %v1753 = vrot.slane %v1752, 1
    %v1754 = vadd.f32 %v1752, %v1753
    %1755 = vadd.xlane.f32.xlu0 %v1754
    %v1756 = vpop.xlane.xlu0 %1755
    %s1757 = vtos %v1756
    %s1758 = smul.f32 %s1757, 7.7351484e-05
    %s1759 = scalar_lea.smem [#allocation6], 0
    %1760 = sst [smem:[%s1759]] %s1758
    // Predicated region
    $region18: #{autoencoder_forward.1} parent=1 // pred_check
      _
    $region19: #{autoencoder_forward.1} parent=1 // pred_check_branch
      %1762 = sbr.rel (0) target = $region21
    $region20: #{autoencoder_forward.1} parent=1 // pred_region
      _
    $region21: #{autoencoder_forward.1} parent=1 // pred_fallthru
      _
    // Predicated region
    $region22: #{autoencoder_forward.1} parent=1 // pred_check
      _
    $region23: #{autoencoder_forward.1} parent=1 // pred_check_branch
      %1764 = sbr.rel (0) target = $region25
    $region24: #{autoencoder_forward.1} parent=1 // pred_region
      %s1766 = ssub.s32 16, 16
      %1767 = vsyncadd [#allocation5], %s1766
      %1770 = dma.smem_to_hbm [#allocation6], 16, %s4, [#allocation5]
    $region25: #{autoencoder_forward.1} parent=1 // pred_fallthru
      _
    // Predicated region
    $region26: #{autoencoder_forward.1} parent=1 // pred_check
      _
    $region27: #{autoencoder_forward.1} parent=1 // pred_check_branch
      %1772 = sbr.rel (0) target = $region29
    $region28: #{autoencoder_forward.1} parent=1 // pred_region
      _
    $region29: #{autoencoder_forward.1} parent=1 // pred_fallthru
      _
    // Predicated region
    $region30: #{autoencoder_forward.1} parent=1 // pred_check
      _
    $region31: #{autoencoder_forward.1} parent=1 // pred_check_branch
      %1774 = sbr.rel (0) target = $region33
    $region32: #{autoencoder_forward.1} parent=1 // pred_region
      %1775 = dma.done [#allocation5], 16
    $region33: #{autoencoder_forward.1} parent=1 // pred_fallthru
      _
    %1776 = sfence
    %1777 = vsyncpa [#allocation4], 1
    %1778 = vsyncpa [#allocation5], 1

</llo_original>
